<compile_context>
chip_gen: v7x
topology: tpu7x:2x2x1
jax: 0.10.0
libtpu: 0.0.40
codegen_flags: <defaults>
</compile_context>

<pallas_src>
import functools

import jax
import jax.numpy as jnp
from jax import lax
from jax.experimental import pallas as pl
from jax.experimental.pallas import tpu as pltpu


def _conv_block_kernel(x_ref, w_ref, shift_ref, mask_ref, sel_ref, out_ref,
                       *, Wp, LZ, LB):
    # x_ref    : (1, C, F)   zero-padded, row-flattened input, one batch element
    #                        (F = LB + LZ + Wp + 1,  LZ = Hp*Wp,  LB = Wp + 1)
    # w_ref    : (9, C, C)   conv taps (ky*3+kx, Cout, Cin), BN scale pre-folded
    # shift_ref: (C, 1)      folded conv-bias + BatchNorm shift
    # mask_ref : (1, LZ)     1.0 at real pixels of the padded plane, 0.0 at pads
    # sel_ref  : (LZ-1-Wp, HO*WO)  0/1 matrix gathering the pooled positions
    # out_ref  : (1, C, HO*WO)

    x = x_ref[0]                                           # (C, F)

    # --- 3x3 "same" conv: 9 lane-shifted views of the same buffer on the MXU ---
    acc = None
    for dy in range(3):
        for dx in range(3):
            tap = dy * 3 + dx
            start = LB + (dy - 1) * Wp + (dx - 1)          # static, in [0, 2*Wp+2]
            part = jnp.dot(w_ref[tap], x[:, start:start + LZ],
                           preferred_element_type=jnp.float32)
            acc = part if acc is None else acc + part      # (C, LZ)

    # --- folded bias + BN shift, ReLU, zero out non-pixel positions -----------
    z = jnp.maximum(acc + shift_ref[...], 0.0) * mask_ref[...]       # (C, LZ)

    # --- MaxPool2d(2,2,pad=1) == aligned 2x2/stride-2 pool over the padded plane
    s = jnp.maximum(z[:, :LZ - 1], z[:, 1:])               # neighbouring columns
    p = jnp.maximum(s[:, :LZ - 1 - Wp], s[:, Wp:])         # neighbouring rows
    # p[:, 2*oi*Wp + 2*oj] is the pooled value for output pixel (oi, oj);
    # gather all of them with one 0/1 matmul -> single dense store.
    out_ref[0] = jnp.dot(p, sel_ref[...], preferred_element_type=jnp.float32)


def conv_block_forward(x_nchw, w_oihw, conv_bias, gamma, beta,
                       running_mean, running_var, eps=1e-5):
    N, C, H, W = x_nchw.shape
    assert H % 2 == 0 and W % 2 == 0, "kernel assumes even spatial dims"
    Hp, Wp = H + 2, W + 2                      # conv zero-padded plane
    HO = (H + 2 - 2) // 2 + 1                  # MaxPool2d(2,2,pad=1) output dims
    WO = (W + 2 - 2) // 2 + 1
    LZ = Hp * Wp                               # flattened padded plane
    LB = Wp + 1                                # left guard so all tap slices fit
    F = LB + LZ + Wp + 1                       # guarded flat buffer length
    LP = LZ - 1 - Wp                           # length after the two pool shifts
    f32 = jnp.float32

    # --- glue (plain JAX, no transposes): pad + flatten + guard-pad ------------
    xp = jnp.pad(x_nchw.astype(f32), ((0, 0), (0, 0), (1, 1), (1, 1)))
    xf = jnp.pad(xp.reshape(N, C, LZ), ((0, 0), (0, 0), (LB, Wp + 1)))  # (N,C,F)

    # --- fold BatchNorm (inference) into conv weights / per-channel shift ------
    scale = gamma / jnp.sqrt(running_var + eps)                         # (C,)
    shift = ((conv_bias - running_mean) * scale + beta).astype(f32)
    w_k = jnp.transpose(w_oihw * scale[:, None, None, None],
                        (2, 3, 0, 1)).reshape(9, C, C).astype(f32)      # (tap,Co,Ci)
    shift2 = shift.reshape(C, 1)

    # --- validity mask of the padded plane (real pixels only) ------------------
    j = jnp.arange(LZ)
    row, col = j // Wp, j % Wp
    mask = (((row >= 1) & (row <= H) & (col >= 1) & (col <= W))
            .astype(f32).reshape(1, LZ))

    # --- 0/1 selection matrix gathering the HO*WO pooled positions -------------
    rows = (2 * Wp * jnp.arange(HO)[:, None]
            + 2 * jnp.arange(WO)[None, :]).reshape(-1)                  # (HO*WO,)
    sel = jnp.zeros((LP, HO * WO), f32).at[rows, jnp.arange(HO * WO)].set(1.0)

    kernel = functools.partial(_conv_block_kernel, Wp=Wp, LZ=LZ, LB=LB)
    out_flat = pl.pallas_call(
        kernel,
        out_shape=jax.ShapeDtypeStruct((N, C, HO * WO), f32),
        grid=(N,),
        in_specs=[
            pl.BlockSpec((1, C, F), lambda n: (n, 0, 0)),
            pl.BlockSpec((9, C, C), lambda n: (0, 0, 0)),
            pl.BlockSpec((C, 1), lambda n: (0, 0)),
            pl.BlockSpec((1, LZ), lambda n: (0, 0)),
            pl.BlockSpec((LP, HO * WO), lambda n: (0, 0)),
        ],
        out_specs=pl.BlockSpec((1, C, HO * WO), lambda n: (n, 0, 0)),
        compiler_params=pltpu.CompilerParams(
            dimension_semantics=("parallel",)),
    )(xf, w_k, shift2, mask, sel)

    return out_flat.reshape(N, C, HO, WO)      # free view back to NCHW


def conv_block_reference(x, w, b, gamma, beta, rmean, rvar, eps=1e-5):
    """Pure-JAX reference with identical (eval-mode) semantics."""
    y = lax.conv_general_dilated(
        x, w, window_strides=(1, 1), padding=((1, 1), (1, 1)),
        dimension_numbers=("NCHW", "OIHW", "NCHW"))
    y = y + b[None, :, None, None]
    y = (y - rmean[None, :, None, None]) * (
        gamma[None, :, None, None] / jnp.sqrt(rvar[None, :, None, None] + eps)
    ) + beta[None, :, None, None]
    y = jnp.maximum(y, 0.0)
    y = lax.reduce_window(y, -jnp.inf, lax.max,
                          window_dimensions=(1, 1, 2, 2),
                          window_strides=(1, 1, 2, 2),
                          padding=((0, 0), (0, 0), (1, 1), (1, 1)))
    return y


if __name__ == "__main__":
    # ConvBlock(channels=8, dim=(2, 4))  ->  BatchNorm2d(2*4=8) matches channels.
    N, C, H, W = 2, 8, 16, 16
    key = jax.random.PRNGKey(0)
    k = jax.random.split(key, 7)
    x = jax.random.normal(k[0], (N, C, H, W), jnp.float32)
    w = jax.random.normal(k[1], (C, C, 3, 3), jnp.float32) * 0.1   # Conv2d weight
    b = jax.random.normal(k[2], (C,), jnp.float32) * 0.1           # Conv2d bias
    gamma = jax.random.uniform(k[3], (C,), jnp.float32, 0.5, 1.5)  # BN weight
    beta = jax.random.normal(k[4], (C,), jnp.float32) * 0.1        # BN bias
    rmean = jax.random.normal(k[5], (C,), jnp.float32) * 0.1       # BN running_mean
    rvar = jax.random.uniform(k[6], (C,), jnp.float32, 0.5, 1.5)   # BN running_var

    out = conv_block_forward(x, w, b, gamma, beta, rmean, rvar)
    out = jax.block_until_ready(out)

    ref = conv_block_reference(x, w, b, gamma, beta, rmean, rvar)
    assert out.shape == (N, C, 9, 9), out.shape
    assert jnp.allclose(out, ref, atol=2e-4, rtol=2e-4), \
        float(jnp.max(jnp.abs(out - ref)))
    print("KERNEL_OK")
</pallas_src>

<mosaic_0001>
module attributes {stable_mosaic.version = 11 : i64} {
  func.func @_conv_block_kernel(%arg0: i32, %arg1: memref<1x8x362xf32, #tpu.memory_space<vmem>>, %arg2: memref<9x8x8xf32, #tpu.memory_space<vmem>>, %arg3: memref<8x1xf32, #tpu.memory_space<vmem>>, %arg4: memref<1x324xf32, #tpu.memory_space<vmem>>, %arg5: memref<305x81xf32, #tpu.memory_space<vmem>>, %arg6: memref<1x8x81xf32, #tpu.memory_space<vmem>>) attributes {dimension_semantics = [#tpu.dimension_semantics<parallel>], iteration_bounds = array<i64: 2>, scalar_prefetch = 0 : i64, scratch_operands = 0 : i64, tpu.core_type = #tpu.core_type<tc>, window_params = [{transform_indices = @transform_0, window_bounds = array<i64: 1, 8, 362>}, {pipeline_mode = #tpu.pipeline_mode<synchronous>, transform_indices = @transform_1, window_bounds = array<i64: 9, 8, 8>}, {pipeline_mode = #tpu.pipeline_mode<synchronous>, transform_indices = @transform_2, window_bounds = array<i64: 8, 1>}, {pipeline_mode = #tpu.pipeline_mode<synchronous>, transform_indices = @transform_3, window_bounds = array<i64: 1, 324>}, {pipeline_mode = #tpu.pipeline_mode<synchronous>, transform_indices = @transform_4, window_bounds = array<i64: 305, 81>}, {transform_indices = @transform_5, window_bounds = array<i64: 1, 8, 81>}]} {
    %c0 = arith.constant 0 : index
    %c0_0 = arith.constant 0 : index
    %c0_1 = arith.constant 0 : index
    %0 = vector.load %arg1[%c0, %c0_0, %c0_1] : memref<1x8x362xf32, #tpu.memory_space<vmem>>, vector<1x8x362xf32>
    %1 = vector.shape_cast %0 : vector<1x8x362xf32> to vector<8x362xf32>
    %c0_2 = arith.constant 0 : index
    %c0_3 = arith.constant 0 : index
    %c0_4 = arith.constant 0 : index
    %2 = vector.load %arg2[%c0_2, %c0_3, %c0_4] : memref<9x8x8xf32, #tpu.memory_space<vmem>>, vector<1x8x8xf32>
    %3 = vector.shape_cast %2 : vector<1x8x8xf32> to vector<8x8xf32>
    %4 = vector.extract_strided_slice %1 {offsets = [0, 0], sizes = [8, 324], strides = [1, 1]} : vector<8x362xf32> to vector<8x324xf32>
    %cst = arith.constant dense<0.000000e+00> : vector<8x324xf32>
    %5 = tpu.matmul %3, %4, %cst {dimension_numbers = #tpu.dot_dimension_numbers<[1], [0], [0], [1], [0, 0, 1, 1], [], []>} : vector<8x8xf32>, vector<8x324xf32>, vector<8x324xf32> -> vector<8x324xf32>
    %c1 = arith.constant 1 : index
    %c0_5 = arith.constant 0 : index
    %c0_6 = arith.constant 0 : index
    %6 = vector.load %arg2[%c1, %c0_5, %c0_6] : memref<9x8x8xf32, #tpu.memory_space<vmem>>, vector<1x8x8xf32>
    %7 = vector.shape_cast %6 : vector<1x8x8xf32> to vector<8x8xf32>
    %8 = vector.extract_strided_slice %1 {offsets = [0, 1], sizes = [8, 324], strides = [1, 1]} : vector<8x362xf32> to vector<8x324xf32>
    %cst_7 = arith.constant dense<0.000000e+00> : vector<8x324xf32>
    %9 = tpu.matmul %7, %8, %cst_7 {dimension_numbers = #tpu.dot_dimension_numbers<[1], [0], [0], [1], [0, 0, 1, 1], [], []>} : vector<8x8xf32>, vector<8x324xf32>, vector<8x324xf32> -> vector<8x324xf32>
    %10 = arith.addf %5, %9 : vector<8x324xf32>
    %c2 = arith.constant 2 : index
    %c0_8 = arith.constant 0 : index
    %c0_9 = arith.constant 0 : index
    %11 = vector.load %arg2[%c2, %c0_8, %c0_9] : memref<9x8x8xf32, #tpu.memory_space<vmem>>, vector<1x8x8xf32>
    %12 = vector.shape_cast %11 : vector<1x8x8xf32> to vector<8x8xf32>
    %13 = vector.extract_strided_slice %1 {offsets = [0, 2], sizes = [8, 324], strides = [1, 1]} : vector<8x362xf32> to vector<8x324xf32>
    %cst_10 = arith.constant dense<0.000000e+00> : vector<8x324xf32>
    %14 = tpu.matmul %12, %13, %cst_10 {dimension_numbers = #tpu.dot_dimension_numbers<[1], [0], [0], [1], [0, 0, 1, 1], [], []>} : vector<8x8xf32>, vector<8x324xf32>, vector<8x324xf32> -> vector<8x324xf32>
    %15 = arith.addf %10, %14 : vector<8x324xf32>
    %c3 = arith.constant 3 : index
    %c0_11 = arith.constant 0 : index
    %c0_12 = arith.constant 0 : index
    %16 = vector.load %arg2[%c3, %c0_11, %c0_12] : memref<9x8x8xf32, #tpu.memory_space<vmem>>, vector<1x8x8xf32>
    %17 = vector.shape_cast %16 : vector<1x8x8xf32> to vector<8x8xf32>
    %18 = vector.extract_strided_slice %1 {offsets = [0, 18], sizes = [8, 324], strides = [1, 1]} : vector<8x362xf32> to vector<8x324xf32>
    %cst_13 = arith.constant dense<0.000000e+00> : vector<8x324xf32>
    %19 = tpu.matmul %17, %18, %cst_13 {dimension_numbers = #tpu.dot_dimension_numbers<[1], [0], [0], [1], [0, 0, 1, 1], [], []>} : vector<8x8xf32>, vector<8x324xf32>, vector<8x324xf32> -> vector<8x324xf32>
    %20 = arith.addf %15, %19 : vector<8x324xf32>
    %c4 = arith.constant 4 : index
    %c0_14 = arith.constant 0 : index
    %c0_15 = arith.constant 0 : index
    %21 = vector.load %arg2[%c4, %c0_14, %c0_15] : memref<9x8x8xf32, #tpu.memory_space<vmem>>, vector<1x8x8xf32>
    %22 = vector.shape_cast %21 : vector<1x8x8xf32> to vector<8x8xf32>
    %23 = vector.extract_strided_slice %1 {offsets = [0, 19], sizes = [8, 324], strides = [1, 1]} : vector<8x362xf32> to vector<8x324xf32>
    %cst_16 = arith.constant dense<0.000000e+00> : vector<8x324xf32>
    %24 = tpu.matmul %22, %23, %cst_16 {dimension_numbers = #tpu.dot_dimension_numbers<[1], [0], [0], [1], [0, 0, 1, 1], [], []>} : vector<8x8xf32>, vector<8x324xf32>, vector<8x324xf32> -> vector<8x324xf32>
    %25 = arith.addf %20, %24 : vector<8x324xf32>
    %c5 = arith.constant 5 : index
    %c0_17 = arith.constant 0 : index
    %c0_18 = arith.constant 0 : index
    %26 = vector.load %arg2[%c5, %c0_17, %c0_18] : memref<9x8x8xf32, #tpu.memory_space<vmem>>, vector<1x8x8xf32>
    %27 = vector.shape_cast %26 : vector<1x8x8xf32> to vector<8x8xf32>
    %28 = vector.extract_strided_slice %1 {offsets = [0, 20], sizes = [8, 324], strides = [1, 1]} : vector<8x362xf32> to vector<8x324xf32>
    %cst_19 = arith.constant dense<0.000000e+00> : vector<8x324xf32>
    %29 = tpu.matmul %27, %28, %cst_19 {dimension_numbers = #tpu.dot_dimension_numbers<[1], [0], [0], [1], [0, 0, 1, 1], [], []>} : vector<8x8xf32>, vector<8x324xf32>, vector<8x324xf32> -> vector<8x324xf32>
    %30 = arith.addf %25, %29 : vector<8x324xf32>
    %c6 = arith.constant 6 : index
    %c0_20 = arith.constant 0 : index
    %c0_21 = arith.constant 0 : index
    %31 = vector.load %arg2[%c6, %c0_20, %c0_21] : memref<9x8x8xf32, #tpu.memory_space<vmem>>, vector<1x8x8xf32>
    %32 = vector.shape_cast %31 : vector<1x8x8xf32> to vector<8x8xf32>
    %33 = vector.extract_strided_slice %1 {offsets = [0, 36], sizes = [8, 324], strides = [1, 1]} : vector<8x362xf32> to vector<8x324xf32>
    %cst_22 = arith.constant dense<0.000000e+00> : vector<8x324xf32>
    %34 = tpu.matmul %32, %33, %cst_22 {dimension_numbers = #tpu.dot_dimension_numbers<[1], [0], [0], [1], [0, 0, 1, 1], [], []>} : vector<8x8xf32>, vector<8x324xf32>, vector<8x324xf32> -> vector<8x324xf32>
    %35 = arith.addf %30, %34 : vector<8x324xf32>
    %c7 = arith.constant 7 : index
    %c0_23 = arith.constant 0 : index
    %c0_24 = arith.constant 0 : index
    %36 = vector.load %arg2[%c7, %c0_23, %c0_24] : memref<9x8x8xf32, #tpu.memory_space<vmem>>, vector<1x8x8xf32>
    %37 = vector.shape_cast %36 : vector<1x8x8xf32> to vector<8x8xf32>
    %38 = vector.extract_strided_slice %1 {offsets = [0, 37], sizes = [8, 324], strides = [1, 1]} : vector<8x362xf32> to vector<8x324xf32>
    %cst_25 = arith.constant dense<0.000000e+00> : vector<8x324xf32>
    %39 = tpu.matmul %37, %38, %cst_25 {dimension_numbers = #tpu.dot_dimension_numbers<[1], [0], [0], [1], [0, 0, 1, 1], [], []>} : vector<8x8xf32>, vector<8x324xf32>, vector<8x324xf32> -> vector<8x324xf32>
    %40 = arith.addf %35, %39 : vector<8x324xf32>
    %c8 = arith.constant 8 : index
    %c0_26 = arith.constant 0 : index
    %c0_27 = arith.constant 0 : index
    %41 = vector.load %arg2[%c8, %c0_26, %c0_27] : memref<9x8x8xf32, #tpu.memory_space<vmem>>, vector<1x8x8xf32>
    %42 = vector.shape_cast %41 : vector<1x8x8xf32> to vector<8x8xf32>
    %43 = vector.extract_strided_slice %1 {offsets = [0, 38], sizes = [8, 324], strides = [1, 1]} : vector<8x362xf32> to vector<8x324xf32>
    %cst_28 = arith.constant dense<0.000000e+00> : vector<8x324xf32>
    %44 = tpu.matmul %42, %43, %cst_28 {dimension_numbers = #tpu.dot_dimension_numbers<[1], [0], [0], [1], [0, 0, 1, 1], [], []>} : vector<8x8xf32>, vector<8x324xf32>, vector<8x324xf32> -> vector<8x324xf32>
    %45 = arith.addf %40, %44 : vector<8x324xf32>
    %c0_29 = arith.constant 0 : index
    %c0_30 = arith.constant 0 : index
    %46 = vector.load %arg3[%c0_29, %c0_30] : memref<8x1xf32, #tpu.memory_space<vmem>>, vector<8x1xf32>
    %47 = vector.broadcast %46 : vector<8x1xf32> to vector<8x324xf32>
    %48 = arith.addf %45, %47 : vector<8x324xf32>
    %cst_31 = arith.constant 0.000000e+00 : f32
    %49 = vector.broadcast %cst_31 : f32 to vector<8x324xf32>
    %50 = arith.maximumf %48, %49 : vector<8x324xf32>
    %c0_32 = arith.constant 0 : index
    %c0_33 = arith.constant 0 : index
    %51 = vector.load %arg4[%c0_32, %c0_33] : memref<1x324xf32, #tpu.memory_space<vmem>>, vector<1x324xf32>
    %52 = vector.broadcast %51 : vector<1x324xf32> to vector<8x324xf32>
    %53 = arith.mulf %50, %52 : vector<8x324xf32>
    %54 = vector.extract_strided_slice %53 {offsets = [0, 0], sizes = [8, 323], strides = [1, 1]} : vector<8x324xf32> to vector<8x323xf32>
    %55 = vector.extract_strided_slice %53 {offsets = [0, 1], sizes = [8, 323], strides = [1, 1]} : vector<8x324xf32> to vector<8x323xf32>
    %56 = arith.maximumf %54, %55 : vector<8x323xf32>
    %57 = vector.extract_strided_slice %56 {offsets = [0, 0], sizes = [8, 305], strides = [1, 1]} : vector<8x323xf32> to vector<8x305xf32>
    %58 = vector.extract_strided_slice %56 {offsets = [0, 18], sizes = [8, 305], strides = [1, 1]} : vector<8x323xf32> to vector<8x305xf32>
    %59 = arith.maximumf %57, %58 : vector<8x305xf32>
    %c0_34 = arith.constant 0 : index
    %c0_35 = arith.constant 0 : index
    %60 = vector.load %arg5[%c0_34, %c0_35] : memref<305x81xf32, #tpu.memory_space<vmem>>, vector<305x81xf32>
    %cst_36 = arith.constant dense<0.000000e+00> : vector<8x81xf32>
    %61 = tpu.matmul %59, %60, %cst_36 {dimension_numbers = #tpu.dot_dimension_numbers<[1], [0], [0], [1], [0, 0, 1, 1], [], []>} : vector<8x305xf32>, vector<305x81xf32>, vector<8x81xf32> -> vector<8x81xf32>
    %c0_37 = arith.constant 0 : index
    %c0_38 = arith.constant 0 : index
    %c0_39 = arith.constant 0 : index
    %62 = vector.load %arg6[%c0_37, %c0_38, %c0_39] : memref<1x8x81xf32, #tpu.memory_space<vmem>>, vector<1x8x81xf32>
    %63 = vector.shape_cast %62 : vector<1x8x81xf32> to vector<8x81xf32>
    %64 = vector.shape_cast %61 : vector<8x81xf32> to vector<1x8x81xf32>
    tpu.vector_store %arg6[%c0_37, %c0_38, %c0_39], %64 {strides = array<i32>} : memref<1x8x81xf32, #tpu.memory_space<vmem>>, vector<1x8x81xf32>,
    return
  }
  func.func @transform_0(%arg0: i32) -> (i32, i32, i32) {
    %c0_i32 = arith.constant 0 : i32
    %c0_i32_0 = arith.constant 0 : i32
    %c0_i32_1 = arith.constant 0 : i32
    return %arg0, %c0_i32, %c0_i32_0 : i32, i32, i32
  }
  func.func @transform_1(%arg0: i32) -> (i32, i32, i32) {
    %c0_i32 = arith.constant 0 : i32
    %c0_i32_0 = arith.constant 0 : i32
    %c0_i32_1 = arith.constant 0 : i32
    %c0_i32_2 = arith.constant 0 : i32
    return %c0_i32, %c0_i32_0, %c0_i32_1 : i32, i32, i32
  }
  func.func @transform_2(%arg0: i32) -> (i32, i32) {
    %c0_i32 = arith.constant 0 : i32
    %c0_i32_0 = arith.constant 0 : i32
    %c0_i32_1 = arith.constant 0 : i32
    return %c0_i32, %c0_i32_0 : i32, i32
  }
  func.func @transform_3(%arg0: i32) -> (i32, i32) {
    %c0_i32 = arith.constant 0 : i32
    %c0_i32_0 = arith.constant 0 : i32
    %c0_i32_1 = arith.constant 0 : i32
    return %c0_i32, %c0_i32_0 : i32, i32
  }
  func.func @transform_4(%arg0: i32) -> (i32, i32) {
    %c0_i32 = arith.constant 0 : i32
    %c0_i32_0 = arith.constant 0 : i32
    %c0_i32_1 = arith.constant 0 : i32
    return %c0_i32, %c0_i32_0 : i32, i32
  }
  func.func @transform_5(%arg0: i32) -> (i32, i32, i32) {
    %c0_i32 = arith.constant 0 : i32
    %c0_i32_0 = arith.constant 0 : i32
    %c0_i32_1 = arith.constant 0 : i32
    return %arg0, %c0_i32, %c0_i32_0 : i32, i32, i32
  }
}

</mosaic_0001>

<llo_original>
// kernel: tpu_custom_call.1
$region0: #{tpu_custom_call.1}
  #allocation0 [shape = 'u32[]', space=smem, size = 0x4, offset = 0x4, fixed_abs, tag = 'smem constant byte address 0x4 - core index']
  #allocation1 [shape = 'u32[144,128]{1,0:T(1,128)}', space=vmem, size = 0x12000, scoped, tag = 'internal scratch']
  %s0 = inlined_call_operand.vmem [shape: f32[2,8,362], index: 0, kind: input, shape index: {}]
  %s1 = inlined_call_operand.vmem [shape: f32[9,8,8], index: 1, kind: input, shape index: {}]
  %s2 = inlined_call_operand.vmem [shape: f32[8,1], index: 2, kind: input, shape index: {}]
  %s3 = inlined_call_operand.vmem [shape: f32[1,324], index: 3, kind: input, shape index: {}]
  %s4 = inlined_call_operand.vmem [shape: f32[305,81], index: 4, kind: input, shape index: {}]
  %s5 = inlined_call_operand.hbm [shape: f32[2,8,81], index: 5, kind: output, shape index: {}]
  %s6 = sld [smem:[#allocation0]]
  $region53: #{tpu_custom_call.1} parent=0
    _
  %s8 = ssub.s32 1, %s6
  %s9 = scalar_select 0, %s8, %s6
  $region1: #{tpu_custom_call.1} parent=0
    #allocation2 [shape = 'u8[8192]{0}', space=vmem, size = 0x2000, scoped, tag = 'output window, operand 0']
    #allocation3 [shape = 's32[2]{0}', space=sflag, size = 0x8, scoped, tag = 'scoped memory for tpu_custom_call.1']
    %10 = vsyncpa [#allocation3], 0
    %s11 = scalar_lea.sflag [#allocation3], 1
    %12 = vsyncpa %s11, 0
    loop: start=0, step=1, limit=4
    $region2: #{tpu_custom_call.1} parent=1 // loop_pre_header
      _
    $region3: #{tpu_custom_call.1} parent=1 // loop_header
      %s14 = sphi 0, %s18
      %p15 = scmp.ge.s32.totalorder %s14, 4
      %s24 = sphi 0, %s26
      %s27 = sphi 0, %s24
      %s28 = sphi 0, %s27
      %s44 = sphi 0, %s28
      %s48 = sphi 0, %s48
      %s50 = sphi 0, %s48
      %s51 = sphi 0, %s50
      %s65 = sphi 0, %s51
      %s69 = sphi 0, %s69
      %s71 = sphi 0, %s69
      %s72 = sphi 0, %s71
      %s86 = sphi 0, %s72
      %s90 = sphi 0, %s90
      %s92 = sphi 0, %s90
      %s93 = sphi 0, %s92
      %s107 = sphi 0, %s93
      %s111 = sphi 0, %s111
      %s113 = sphi 0, %s111
      %s114 = sphi 0, %s113
      %s128 = sphi 0, %s114
      %s134 = sphi 0, %s136
      %s137 = sphi 0, %s134
      %s138 = sphi 0, %s137
      %s154 = sphi 0, %s138
    $region4: #{tpu_custom_call.1} parent=1 // loop_header_branch
      %17 = sbr.rel (%p15) target = $region8
    $region5: #{tpu_custom_call.1} parent=1 // loop_body
      %s19 = ssub.s32 %s14, 1
      %s20 = ssub.s32 %s14, 2
      %s21 = sadd.s32 %s14, 1
      %s22 = ssub.s32 %s14, %s21
      %p23 = scmp.eq.s32.totalorder %s22, 0
      %s25 = sadd.s32 %s24, 1
      %s26 = scalar_select %p23, %s24, %s25
      %p29 = pneg %p23
      %p30 = scmp.eq.s32.totalorder %s14, 1
      %p31 = por %p29, %p30
      %p32 = scmp.ne.s32.totalorder %s24, %s27
      %p33 = scmp.eq.s32.totalorder %s14, 0
      %p34 = por %p32, %p33
      %p35 = scmp.ne.s32.totalorder %s24, %s27
      %p36 = scmp.eq.s32.totalorder %s19, 1
      %p37 = por %p35, %p36
      %p38 = scmp.ne.s32.totalorder %s27, %s28
      %p39 = scmp.eq.s32.totalorder %s19, 0
      %p40 = por %p38, %p39
      %p41 = scmp.ne.s32.totalorder %s27, %s28
      %p42 = scmp.eq.s32.totalorder %s20, 1
      %p43 = por %p41, %p42
      %p45 = scmp.ne.s32.totalorder %s28, %s44
      %p46 = scmp.eq.s32.totalorder %s20, 0
      %p47 = por %p45, %p46
      %s49 = sadd.s32 %s48, 1
      %p52 = scmp.eq.s32.totalorder %s14, 1
      %p53 = scmp.ne.s32.totalorder %s48, %s50
      %p54 = scmp.eq.s32.totalorder %s14, 0
      %p55 = por %p53, %p54
      %p56 = scmp.ne.s32.totalorder %s48, %s50
      %p57 = scmp.eq.s32.totalorder %s19, 1
      %p58 = por %p56, %p57
      %p59 = scmp.ne.s32.totalorder %s50, %s51
      %p60 = scmp.eq.s32.totalorder %s19, 0
      %p61 = por %p59, %p60
      %p62 = scmp.ne.s32.totalorder %s50, %s51
      %p63 = scmp.eq.s32.totalorder %s20, 1
      %p64 = por %p62, %p63
      %p66 = scmp.ne.s32.totalorder %s51, %s65
      %p67 = scmp.eq.s32.totalorder %s20, 0
      %p68 = por %p66, %p67
      %s70 = sadd.s32 %s69, 1
      %p73 = scmp.eq.s32.totalorder %s14, 1
      %p74 = scmp.ne.s32.totalorder %s69, %s71
      %p75 = scmp.eq.s32.totalorder %s14, 0
      %p76 = por %p74, %p75
      %p77 = scmp.ne.s32.totalorder %s69, %s71
      %p78 = scmp.eq.s32.totalorder %s19, 1
      %p79 = por %p77, %p78
      %p80 = scmp.ne.s32.totalorder %s71, %s72
      %p81 = scmp.eq.s32.totalorder %s19, 0
      %p82 = por %p80, %p81
      %p83 = scmp.ne.s32.totalorder %s71, %s72
      %p84 = scmp.eq.s32.totalorder %s20, 1
      %p85 = por %p83, %p84
      %p87 = scmp.ne.s32.totalorder %s72, %s86
      %p88 = scmp.eq.s32.totalorder %s20, 0
      %p89 = por %p87, %p88
      %s91 = sadd.s32 %s90, 1
      %p94 = scmp.eq.s32.totalorder %s14, 1
      %p95 = scmp.ne.s32.totalorder %s90, %s92
      %p96 = scmp.eq.s32.totalorder %s14, 0
      %p97 = por %p95, %p96
      %p98 = scmp.ne.s32.totalorder %s90, %s92
      %p99 = scmp.eq.s32.totalorder %s19, 1
      %p100 = por %p98, %p99
      %p101 = scmp.ne.s32.totalorder %s92, %s93
      %p102 = scmp.eq.s32.totalorder %s19, 0
      %p103 = por %p101, %p102
      %p104 = scmp.ne.s32.totalorder %s92, %s93
      %p105 = scmp.eq.s32.totalorder %s20, 1
      %p106 = por %p104, %p105
      %p108 = scmp.ne.s32.totalorder %s93, %s107
      %p109 = scmp.eq.s32.totalorder %s20, 0
      %p110 = por %p108, %p109
      %s112 = sadd.s32 %s111, 1
      %p115 = scmp.eq.s32.totalorder %s14, 1
      %p116 = scmp.ne.s32.totalorder %s111, %s113
      %p117 = scmp.eq.s32.totalorder %s14, 0
      %p118 = por %p116, %p117
      %p119 = scmp.ne.s32.totalorder %s111, %s113
      %p120 = scmp.eq.s32.totalorder %s19, 1
      %p121 = por %p119, %p120
      %p122 = scmp.ne.s32.totalorder %s113, %s114
      %p123 = scmp.eq.s32.totalorder %s19, 0
      %p124 = por %p122, %p123
      %p125 = scmp.ne.s32.totalorder %s113, %s114
      %p126 = scmp.eq.s32.totalorder %s20, 1
      %p127 = por %p125, %p126
      %p129 = scmp.ne.s32.totalorder %s114, %s128
      %p130 = scmp.eq.s32.totalorder %s20, 0
      %p131 = por %p129, %p130
      %s132 = ssub.s32 %s14, %s21
      %p133 = scmp.eq.s32.totalorder %s132, 0
      %s135 = sadd.s32 %s134, 1
      %s136 = scalar_select %p133, %s134, %s135
      %p139 = pneg %p133
      %p140 = scmp.eq.s32.totalorder %s14, 1
      %p141 = por %p139, %p140
      %p142 = scmp.ne.s32.totalorder %s134, %s137
      %p143 = scmp.eq.s32.totalorder %s14, 0
      %p144 = por %p142, %p143
      %p145 = scmp.ne.s32.totalorder %s134, %s137
      %p146 = scmp.eq.s32.totalorder %s19, 1
      %p147 = por %p145, %p146
      %p148 = scmp.ne.s32.totalorder %s137, %s138
      %p149 = scmp.eq.s32.totalorder %s19, 0
      %p150 = por %p148, %p149
      %p151 = scmp.ne.s32.totalorder %s137, %s138
      %p152 = scmp.eq.s32.totalorder %s20, 1
      %p153 = por %p151, %p152
      %p155 = scmp.ne.s32.totalorder %s138, %s154
      %p156 = scmp.eq.s32.totalorder %s20, 0
      %p157 = por %p155, %p156
      %p158 = scmp.le.s32.totalorder 1, %s14
      %p159 = scmp.lt.s32.totalorder %s14, 3
      %p160 = pnand %p158, %p159
      %p161 = pneg %p160
      // Predicated region
      $region9: #{tpu_custom_call.1} parent=5 // pred_check
        _
      $region10: #{tpu_custom_call.1} parent=5 // pred_check_branch
        %163 = sbr.rel (%p160) target = $region12
      $region11: #{tpu_custom_call.1} parent=5 // pred_region
        %s164 = ssub.s32 %s14, 1
        // Predicated region
        $region13: #{tpu_custom_call.1} parent=11 // pred_check
          %p165 = pneg %p61
        $region14: #{tpu_custom_call.1} parent=11 // pred_check_branch
          %167 = sbr.rel (%p165) target = $region16
        $region15: #{tpu_custom_call.1} parent=11 // pred_region
          _
        $region16: #{tpu_custom_call.1} parent=11 // pred_fallthru
          _
        // Predicated region
        $region17: #{tpu_custom_call.1} parent=11 // pred_check
          %p168 = pneg %p82
        $region18: #{tpu_custom_call.1} parent=11 // pred_check_branch
          %170 = sbr.rel (%p168) target = $region20
        $region19: #{tpu_custom_call.1} parent=11 // pred_region
          _
        $region20: #{tpu_custom_call.1} parent=11 // pred_fallthru
          _
        // Predicated region
        $region21: #{tpu_custom_call.1} parent=11 // pred_check
          %p171 = pneg %p103
        $region22: #{tpu_custom_call.1} parent=11 // pred_check_branch
          %173 = sbr.rel (%p171) target = $region24
        $region23: #{tpu_custom_call.1} parent=11 // pred_region
          _
        $region24: #{tpu_custom_call.1} parent=11 // pred_fallthru
          _
        // Predicated region
        $region25: #{tpu_custom_call.1} parent=11 // pred_check
          %p174 = pneg %p124
        $region26: #{tpu_custom_call.1} parent=11 // pred_check_branch
          %176 = sbr.rel (%p174) target = $region28
        $region27: #{tpu_custom_call.1} parent=11 // pred_region
          _
        $region28: #{tpu_custom_call.1} parent=11 // pred_fallthru
          _
      $region12: #{tpu_custom_call.1} parent=5 // pred_fallthru
        _
      %p177 = scmp.lt.s32.totalorder %s14, 2
      // Predicated region
      $region29: #{tpu_custom_call.1} parent=5 // pred_check
        %p178 = pneg %p177
      $region30: #{tpu_custom_call.1} parent=5 // pred_check_branch
        %180 = sbr.rel (%p178) target = $region32
      $region31: #{tpu_custom_call.1} parent=5 // pred_region
        // Predicated region
        $region33: #{tpu_custom_call.1} parent=31 // pred_check
          %p181 = pneg %p34
        $region34: #{tpu_custom_call.1} parent=31 // pred_check_branch
          %183 = sbr.rel (%p181) target = $region36
        $region35: #{tpu_custom_call.1} parent=31 // pred_region
          %p184 = scmp.lt.s32.totalorder %s14, 1
          %s185 = scalar_select %p184, %s14, 1
          %s186 = smul.addr %s185, 3
          %s187 = smul.addr %s186, 8
          %s188 = scalar_lea.vmem %s0, %s187
        $region36: #{tpu_custom_call.1} parent=31 // pred_fallthru
          _
      $region32: #{tpu_custom_call.1} parent=5 // pred_fallthru
        _
      %p189 = scmp.le.s32.totalorder 1, %s14
      %p190 = scmp.lt.s32.totalorder %s14, 3
      %p191 = pnand %p189, %p190
      %p192 = pneg %p191
      // Predicated region
      $region37: #{tpu_custom_call.1} parent=5 // pred_check
        _
      $region38: #{tpu_custom_call.1} parent=5 // pred_check_branch
        %194 = sbr.rel (%p191) target = $region40
      $region39: #{tpu_custom_call.1} parent=5 // pred_region
        %s195 = ssub.s32 %s14, 1
        %p196 = scmp.lt.s32.totalorder %s19, 1
        %s197 = scalar_select %p196, %s19, 1
        %s198 = smul.addr %s197, 3
        %s199 = smul.addr %s198, 8
        %s200 = scalar_lea.vmem %s0, %s199
        %p201 = pneg %p40
        %p202 = pneg %p37
        %p203 = pneg %p61
        %p204 = pneg %p58
        %p205 = pneg %p82
        %p206 = pneg %p79
        %p207 = pneg %p103
        %p208 = pneg %p100
        %p209 = pneg %p124
        %p210 = pneg %p121
        %p211 = pneg %p150
        %p212 = pneg %p147
        %s213 = sand.u32 %s137, 1
        %s214 = scalar_lea.sflag [#allocation3], %s213
        %s215 = sand.u32 %s137, 1
        %s216 = smul.addr %s215, 8
        %s217 = scalar_lea.vmem [#allocation2], %s216
        %p218 = scmp.lt.s32.totalorder %s19, 1
        %s219 = scalar_select %p218, %s19, 1
        %s220 = smul.addr %s219, 3
        %s221 = smul.addr %s220, 8
        %s222 = scalar_lea.vmem %s0, %s221
        %v223 = vld [vmem:[%s222] sm:$0xff]
        %v224 = vld [vmem:[%s222 + $0x8] sm:$0xff]
        %v225 = vld [vmem:[%s222 + $0x10] sm:$0xff]
        %v226 = vld [vmem:[%s1] sm:$0xff]
        %s227 = scalar_lea.vmem %s1, 8
        %v228 = vld [vmem:[%s227] sm:$0xff]
        %232 = vrot.lane.b32.xlu0 %v223, 127
        %v233 = vpop.permute.xlu0 %232
        %234 = vrot.lane.b32.xlu0 %v224, 127
        %v235 = vpop.permute.xlu0 %234
        %236 = vrot.lane.b32.xlu0 %v225, 127
        %v237 = vpop.permute.xlu0 %236
        %vm238 = vcmask 1039360
        %v239 = vsel %vm238, %v233, %v235
        %v240 = vsel %vm238, %v235, %v237
        %vm244 = vcmask 64512
        %v246 = vsel %vm244, %v228, 0
        %248 = vmatprep.subr.mxu0 %v240
        %249 = vmatpush1.msra.mxu0 %v239
        %250 = vmatprep.subr.mxu0 0.0
        %251 = vmatpush1.msra.mxu0 0.0
        %252 = vmatprep.subr.mxu0 0.0
        %253 = vmatpush1.msra.mxu0 0.0
        %254 = vmatprep.subr.mxu0 0.0
        %255 = vmatpush1.msra.mxu0 0.0
        %256 = vmatprep.subr.mxu0 0.0
        %257 = vmatpush1.msra.mxu0 0.0
        %258 = vmatprep.subr.mxu0 0.0
        %259 = vmatpush1.msra.mxu0 0.0
        %260 = vmatprep.subr.mxu0 0.0
        %261 = vmatpush1.msra.mxu0 0.0
        %262 = vmatprep.subr.mxu0 0.0
        %263 = vmatpush1.msra.mxu0 0.0
        %264 = vmatprep.subr.mxu0 0.0
        %265 = vmatpush1.msra.mxu0 0.0
        %266 = vmatprep.subr.mxu0 0.0
        %267 = vmatpush1.msra.mxu0 0.0
        %268 = vmatprep.subr.mxu0 0.0
        %269 = vmatpush1.msra.mxu0 0.0
        %270 = vmatprep.subr.mxu0 0.0
        %271 = vmatpush1.msra.mxu0 0.0
        %272 = vmatprep.subr.mxu0 0.0
        %273 = vmatpush1.msra.mxu0 0.0
        %274 = vmatprep.subr.mxu0 0.0
        %275 = vmatpush1.msra.mxu0 0.0
        %276 = vmatprep.subr.mxu0 0.0
        %277 = vmatpush1.msra.mxu0 0.0
        %278 = vmatprep.subr.mxu0 0.0
        %279 = vmatpush1.msra.mxu0 0.0
        %280 = vmatprep.subr.mxu0 0.0
        %281 = vmatpush1.msra.mxu0 0.0
        %282 = vmatprep.subr.mxu0 0.0
        %283 = vmatpush1.msra.mxu0 0.0
        %284 = vmatprep.subr.mxu0 0.0
        %285 = vmatpush1.msra.mxu0 0.0
        %286 = vmatprep.subr.mxu0 0.0
        %287 = vmatpush1.msra.mxu0 0.0
        %288 = vmatprep.subr.mxu0 0.0
        %289 = vmatpush1.msra.mxu0 0.0
        %290 = vmatprep.subr.mxu0 0.0
        %291 = vmatpush1.msra.mxu0 0.0
        %292 = vmatprep.subr.mxu0 0.0
        %293 = vmatpush1.msra.mxu0 0.0
        %294 = vmatprep.subr.mxu0 0.0
        %295 = vmatpush1.msra.mxu0 0.0
        %296 = vmatprep.subr.mxu0 0.0
        %297 = vmatpush1.msra.mxu0 0.0
        %298 = vmatprep.subr.mxu0 0.0
        %299 = vmatpush1.msra.mxu0 0.0
        %300 = vmatprep.subr.mxu0 0.0
        %301 = vmatpush1.msra.mxu0 0.0
        %302 = vmatprep.subr.mxu0 0.0
        %303 = vmatpush1.msra.mxu0 0.0
        %304 = vmatprep.subr.mxu0 0.0
        %305 = vmatpush1.msra.mxu0 0.0
        %306 = vmatprep.subr.mxu0 0.0
        %307 = vmatpush1.msra.mxu0 0.0
        %308 = vmatprep.subr.mxu0 0.0
        %309 = vmatpush1.msra.mxu0 0.0
        %310 = vmatprep.subr.mxu0 0.0
        %311 = vmatpush1.msra.mxu0 0.0
        %312 = vmatprep.mubr.f32.mxu0 0.0
        %313 = vmatmul.mubr.f32.gmra.mrb[0].mxu0 %v246
        %v314 = vpop.f32.mrb[0].mxu0
        %v315 = vadd.f32 0.0, %v314
        %v316 = vpop.f32.mrb[0].mxu0
        %v317 = vadd.f32 0.0, %v316
        %318 = vdwg.mxu0
        %319 = vmatprep.subr.mxu0 0.0
        %320 = vmatpush1.msra.mxu0 %v237
        %321 = vmatprep.subr.mxu0 0.0
        %322 = vmatpush1.msra.mxu0 0.0
        %323 = vmatprep.subr.mxu0 0.0
        %324 = vmatpush1.msra.mxu0 0.0
        %325 = vmatprep.subr.mxu0 0.0
        %326 = vmatpush1.msra.mxu0 0.0
        %327 = vmatprep.subr.mxu0 0.0
        %328 = vmatpush1.msra.mxu0 0.0
        %329 = vmatprep.subr.mxu0 0.0
        %330 = vmatpush1.msra.mxu0 0.0
        %331 = vmatprep.subr.mxu0 0.0
        %332 = vmatpush1.msra.mxu0 0.0
        %333 = vmatprep.subr.mxu0 0.0
        %334 = vmatpush1.msra.mxu0 0.0
        %335 = vmatprep.subr.mxu0 0.0
        %336 = vmatpush1.msra.mxu0 0.0
        %337 = vmatprep.subr.mxu0 0.0
        %338 = vmatpush1.msra.mxu0 0.0
        %339 = vmatprep.subr.mxu0 0.0
        %340 = vmatpush1.msra.mxu0 0.0
        %341 = vmatprep.subr.mxu0 0.0
        %342 = vmatpush1.msra.mxu0 0.0
        %343 = vmatprep.subr.mxu0 0.0
        %344 = vmatpush1.msra.mxu0 0.0
        %345 = vmatprep.subr.mxu0 0.0
        %346 = vmatpush1.msra.mxu0 0.0
        %347 = vmatprep.subr.mxu0 0.0
        %348 = vmatpush1.msra.mxu0 0.0
        %349 = vmatprep.subr.mxu0 0.0
        %350 = vmatpush1.msra.mxu0 0.0
        %351 = vmatprep.subr.mxu0 0.0
        %352 = vmatpush1.msra.mxu0 0.0
        %353 = vmatprep.subr.mxu0 0.0
        %354 = vmatpush1.msra.mxu0 0.0
        %355 = vmatprep.subr.mxu0 0.0
        %356 = vmatpush1.msra.mxu0 0.0
        %357 = vmatprep.subr.mxu0 0.0
        %358 = vmatpush1.msra.mxu0 0.0
        %359 = vmatprep.subr.mxu0 0.0
        %360 = vmatpush1.msra.mxu0 0.0
        %361 = vmatprep.subr.mxu0 0.0
        %362 = vmatpush1.msra.mxu0 0.0
        %363 = vmatprep.subr.mxu0 0.0
        %364 = vmatpush1.msra.mxu0 0.0
        %365 = vmatprep.subr.mxu0 0.0
        %366 = vmatpush1.msra.mxu0 0.0
        %367 = vmatprep.subr.mxu0 0.0
        %368 = vmatpush1.msra.mxu0 0.0
        %369 = vmatprep.subr.mxu0 0.0
        %370 = vmatpush1.msra.mxu0 0.0
        %371 = vmatprep.subr.mxu0 0.0
        %372 = vmatpush1.msra.mxu0 0.0
        %373 = vmatprep.subr.mxu0 0.0
        %374 = vmatpush1.msra.mxu0 0.0
        %375 = vmatprep.subr.mxu0 0.0
        %376 = vmatpush1.msra.mxu0 0.0
        %377 = vmatprep.subr.mxu0 0.0
        %378 = vmatpush1.msra.mxu0 0.0
        %379 = vmatprep.subr.mxu0 0.0
        %380 = vmatpush1.msra.mxu0 0.0
        %381 = vmatprep.subr.mxu0 0.0
        %382 = vmatpush1.msra.mxu0 0.0
        %383 = vmatprep.mubr.f32.mxu0 0.0
        %384 = vmatmul.mubr.f32.gmra.mrb[0].mxu0 %v246
        %v385 = vpop.f32.mrb[0].mxu0
        %v386 = vadd.f32 0.0, %v385
        %v387 = vpop.f32.mrb[0].mxu0
        %388 = vdwg.mxu0
        %v390 = vsel %vm244, %v226, 0
        %392 = vmatprep.subr.mxu0 %v224
        %393 = vmatpush1.msra.mxu0 %v223
        %394 = vmatprep.subr.mxu0 0.0
        %395 = vmatpush1.msra.mxu0 0.0
        %396 = vmatprep.subr.mxu0 0.0
        %397 = vmatpush1.msra.mxu0 0.0
        %398 = vmatprep.subr.mxu0 0.0
        %399 = vmatpush1.msra.mxu0 0.0
        %400 = vmatprep.subr.mxu0 0.0
        %401 = vmatpush1.msra.mxu0 0.0
        %402 = vmatprep.subr.mxu0 0.0
        %403 = vmatpush1.msra.mxu0 0.0
        %404 = vmatprep.subr.mxu0 0.0
        %405 = vmatpush1.msra.mxu0 0.0
        %406 = vmatprep.subr.mxu0 0.0
        %407 = vmatpush1.msra.mxu0 0.0
        %408 = vmatprep.subr.mxu0 0.0
        %409 = vmatpush1.msra.mxu0 0.0
        %410 = vmatprep.subr.mxu0 0.0
        %411 = vmatpush1.msra.mxu0 0.0
        %412 = vmatprep.subr.mxu0 0.0
        %413 = vmatpush1.msra.mxu0 0.0
        %414 = vmatprep.subr.mxu0 0.0
        %415 = vmatpush1.msra.mxu0 0.0
        %416 = vmatprep.subr.mxu0 0.0
        %417 = vmatpush1.msra.mxu0 0.0
        %418 = vmatprep.subr.mxu0 0.0
        %419 = vmatpush1.msra.mxu0 0.0
        %420 = vmatprep.subr.mxu0 0.0
        %421 = vmatpush1.msra.mxu0 0.0
        %422 = vmatprep.subr.mxu0 0.0
        %423 = vmatpush1.msra.mxu0 0.0
        %424 = vmatprep.subr.mxu0 0.0
        %425 = vmatpush1.msra.mxu0 0.0
        %426 = vmatprep.subr.mxu0 0.0
        %427 = vmatpush1.msra.mxu0 0.0
        %428 = vmatprep.subr.mxu0 0.0
        %429 = vmatpush1.msra.mxu0 0.0
        %430 = vmatprep.subr.mxu0 0.0
        %431 = vmatpush1.msra.mxu0 0.0
        %432 = vmatprep.subr.mxu0 0.0
        %433 = vmatpush1.msra.mxu0 0.0
        %434 = vmatprep.subr.mxu0 0.0
        %435 = vmatpush1.msra.mxu0 0.0
        %436 = vmatprep.subr.mxu0 0.0
        %437 = vmatpush1.msra.mxu0 0.0
        %438 = vmatprep.subr.mxu0 0.0
        %439 = vmatpush1.msra.mxu0 0.0
        %440 = vmatprep.subr.mxu0 0.0
        %441 = vmatpush1.msra.mxu0 0.0
        %442 = vmatprep.subr.mxu0 0.0
        %443 = vmatpush1.msra.mxu0 0.0
        %444 = vmatprep.subr.mxu0 0.0
        %445 = vmatpush1.msra.mxu0 0.0
        %446 = vmatprep.subr.mxu0 0.0
        %447 = vmatpush1.msra.mxu0 0.0
        %448 = vmatprep.subr.mxu0 0.0
        %449 = vmatpush1.msra.mxu0 0.0
        %450 = vmatprep.subr.mxu0 0.0
        %451 = vmatpush1.msra.mxu0 0.0
        %452 = vmatprep.subr.mxu0 0.0
        %453 = vmatpush1.msra.mxu0 0.0
        %454 = vmatprep.subr.mxu0 0.0
        %455 = vmatpush1.msra.mxu0 0.0
        %456 = vmatprep.mubr.f32.mxu0 0.0
        %457 = vmatmul.mubr.f32.gmra.mrb[0].mxu0 %v390
        %v458 = vpop.f32.mrb[0].mxu0
        %v459 = vadd.f32 %v315, %v458
        %v460 = vpop.f32.mrb[0].mxu0
        %v461 = vadd.f32 %v317, %v460
        %462 = vdwg.mxu0
        %463 = vmatprep.subr.mxu0 0.0
        %464 = vmatpush1.msra.mxu0 %v225
        %465 = vmatprep.subr.mxu0 0.0
        %466 = vmatpush1.msra.mxu0 0.0
        %467 = vmatprep.subr.mxu0 0.0
        %468 = vmatpush1.msra.mxu0 0.0
        %469 = vmatprep.subr.mxu0 0.0
        %470 = vmatpush1.msra.mxu0 0.0
        %471 = vmatprep.subr.mxu0 0.0
        %472 = vmatpush1.msra.mxu0 0.0
        %473 = vmatprep.subr.mxu0 0.0
        %474 = vmatpush1.msra.mxu0 0.0
        %475 = vmatprep.subr.mxu0 0.0
        %476 = vmatpush1.msra.mxu0 0.0
        %477 = vmatprep.subr.mxu0 0.0
        %478 = vmatpush1.msra.mxu0 0.0
        %479 = vmatprep.subr.mxu0 0.0
        %480 = vmatpush1.msra.mxu0 0.0
        %481 = vmatprep.subr.mxu0 0.0
        %482 = vmatpush1.msra.mxu0 0.0
        %483 = vmatprep.subr.mxu0 0.0
        %484 = vmatpush1.msra.mxu0 0.0
        %485 = vmatprep.subr.mxu0 0.0
        %486 = vmatpush1.msra.mxu0 0.0
        %487 = vmatprep.subr.mxu0 0.0
        %488 = vmatpush1.msra.mxu0 0.0
        %489 = vmatprep.subr.mxu0 0.0
        %490 = vmatpush1.msra.mxu0 0.0
        %491 = vmatprep.subr.mxu0 0.0
        %492 = vmatpush1.msra.mxu0 0.0
        %493 = vmatprep.subr.mxu0 0.0
        %494 = vmatpush1.msra.mxu0 0.0
        %495 = vmatprep.subr.mxu0 0.0
        %496 = vmatpush1.msra.mxu0 0.0
        %497 = vmatprep.subr.mxu0 0.0
        %498 = vmatpush1.msra.mxu0 0.0
        %499 = vmatprep.subr.mxu0 0.0
        %500 = vmatpush1.msra.mxu0 0.0
        %501 = vmatprep.subr.mxu0 0.0
        %502 = vmatpush1.msra.mxu0 0.0
        %503 = vmatprep.subr.mxu0 0.0
        %504 = vmatpush1.msra.mxu0 0.0
        %505 = vmatprep.subr.mxu0 0.0
        %506 = vmatpush1.msra.mxu0 0.0
        %507 = vmatprep.subr.mxu0 0.0
        %508 = vmatpush1.msra.mxu0 0.0
        %509 = vmatprep.subr.mxu0 0.0
        %510 = vmatpush1.msra.mxu0 0.0
        %511 = vmatprep.subr.mxu0 0.0
        %512 = vmatpush1.msra.mxu0 0.0
        %513 = vmatprep.subr.mxu0 0.0
        %514 = vmatpush1.msra.mxu0 0.0
        %515 = vmatprep.subr.mxu0 0.0
        %516 = vmatpush1.msra.mxu0 0.0
        %517 = vmatprep.subr.mxu0 0.0
        %518 = vmatpush1.msra.mxu0 0.0
        %519 = vmatprep.subr.mxu0 0.0
        %520 = vmatpush1.msra.mxu0 0.0
        %521 = vmatprep.subr.mxu0 0.0
        %522 = vmatpush1.msra.mxu0 0.0
        %523 = vmatprep.subr.mxu0 0.0
        %524 = vmatpush1.msra.mxu0 0.0
        %525 = vmatprep.subr.mxu0 0.0
        %526 = vmatpush1.msra.mxu0 0.0
        %527 = vmatprep.mubr.f32.mxu0 0.0
        %528 = vmatmul.mubr.f32.gmra.mrb[0].mxu0 %v390
        %v529 = vpop.f32.mrb[0].mxu0
        %v530 = vadd.f32 %v386, %v529
        %v531 = vpop.f32.mrb[0].mxu0
        %532 = vdwg.mxu0
        %s533 = scalar_lea.vmem %s1, 16
        %v534 = vld [vmem:[%s533] sm:$0xff]
        %535 = vrot.lane.b32.xlu0 %v223, 126
        %v536 = vpop.permute.xlu0 %535
        %537 = vrot.lane.b32.xlu0 %v224, 126
        %v538 = vpop.permute.xlu0 %537
        %539 = vrot.lane.b32.xlu0 %v225, 126
        %v540 = vpop.permute.xlu0 %539
        %vm541 = vcmask 1031168
        %v542 = vsel %vm541, %v536, %v538
        %v543 = vsel %vm541, %v538, %v540
        %v548 = vsel %vm244, %v534, 0
        %550 = vmatprep.subr.mxu0 %v543
        %551 = vmatpush1.msra.mxu0 %v542
        %552 = vmatprep.subr.mxu0 0.0
        %553 = vmatpush1.msra.mxu0 0.0
        %554 = vmatprep.subr.mxu0 0.0
        %555 = vmatpush1.msra.mxu0 0.0
        %556 = vmatprep.subr.mxu0 0.0
        %557 = vmatpush1.msra.mxu0 0.0
        %558 = vmatprep.subr.mxu0 0.0
        %559 = vmatpush1.msra.mxu0 0.0
        %560 = vmatprep.subr.mxu0 0.0
        %561 = vmatpush1.msra.mxu0 0.0
        %562 = vmatprep.subr.mxu0 0.0
        %563 = vmatpush1.msra.mxu0 0.0
        %564 = vmatprep.subr.mxu0 0.0
        %565 = vmatpush1.msra.mxu0 0.0
        %566 = vmatprep.subr.mxu0 0.0
        %567 = vmatpush1.msra.mxu0 0.0
        %568 = vmatprep.subr.mxu0 0.0
        %569 = vmatpush1.msra.mxu0 0.0
        %570 = vmatprep.subr.mxu0 0.0
        %571 = vmatpush1.msra.mxu0 0.0
        %572 = vmatprep.subr.mxu0 0.0
        %573 = vmatpush1.msra.mxu0 0.0
        %574 = vmatprep.subr.mxu0 0.0
        %575 = vmatpush1.msra.mxu0 0.0
        %576 = vmatprep.subr.mxu0 0.0
        %577 = vmatpush1.msra.mxu0 0.0
        %578 = vmatprep.subr.mxu0 0.0
        %579 = vmatpush1.msra.mxu0 0.0
        %580 = vmatprep.subr.mxu0 0.0
        %581 = vmatpush1.msra.mxu0 0.0
        %582 = vmatprep.subr.mxu0 0.0
        %583 = vmatpush1.msra.mxu0 0.0
        %584 = vmatprep.subr.mxu0 0.0
        %585 = vmatpush1.msra.mxu0 0.0
        %586 = vmatprep.subr.mxu0 0.0
        %587 = vmatpush1.msra.mxu0 0.0
        %588 = vmatprep.subr.mxu0 0.0
        %589 = vmatpush1.msra.mxu0 0.0
        %590 = vmatprep.subr.mxu0 0.0
        %591 = vmatpush1.msra.mxu0 0.0
        %592 = vmatprep.subr.mxu0 0.0
        %593 = vmatpush1.msra.mxu0 0.0
        %594 = vmatprep.subr.mxu0 0.0
        %595 = vmatpush1.msra.mxu0 0.0
        %596 = vmatprep.subr.mxu0 0.0
        %597 = vmatpush1.msra.mxu0 0.0
        %598 = vmatprep.subr.mxu0 0.0
        %599 = vmatpush1.msra.mxu0 0.0
        %600 = vmatprep.subr.mxu0 0.0
        %601 = vmatpush1.msra.mxu0 0.0
        %602 = vmatprep.subr.mxu0 0.0
        %603 = vmatpush1.msra.mxu0 0.0
        %604 = vmatprep.subr.mxu0 0.0
        %605 = vmatpush1.msra.mxu0 0.0
        %606 = vmatprep.subr.mxu0 0.0
        %607 = vmatpush1.msra.mxu0 0.0
        %608 = vmatprep.subr.mxu0 0.0
        %609 = vmatpush1.msra.mxu0 0.0
        %610 = vmatprep.subr.mxu0 0.0
        %611 = vmatpush1.msra.mxu0 0.0
        %612 = vmatprep.subr.mxu0 0.0
        %613 = vmatpush1.msra.mxu0 0.0
        %614 = vmatprep.mubr.f32.mxu0 0.0
        %615 = vmatmul.mubr.f32.gmra.mrb[0].mxu0 %v548
        %v616 = vpop.f32.mrb[0].mxu0
        %v617 = vadd.f32 0.0, %v616
        %v618 = vpop.f32.mrb[0].mxu0
        %v619 = vadd.f32 0.0, %v618
        %620 = vdwg.mxu0
        %621 = vmatprep.subr.mxu0 0.0
        %622 = vmatpush1.msra.mxu0 %v540
        %623 = vmatprep.subr.mxu0 0.0
        %624 = vmatpush1.msra.mxu0 0.0
        %625 = vmatprep.subr.mxu0 0.0
        %626 = vmatpush1.msra.mxu0 0.0
        %627 = vmatprep.subr.mxu0 0.0
        %628 = vmatpush1.msra.mxu0 0.0
        %629 = vmatprep.subr.mxu0 0.0
        %630 = vmatpush1.msra.mxu0 0.0
        %631 = vmatprep.subr.mxu0 0.0
        %632 = vmatpush1.msra.mxu0 0.0
        %633 = vmatprep.subr.mxu0 0.0
        %634 = vmatpush1.msra.mxu0 0.0
        %635 = vmatprep.subr.mxu0 0.0
        %636 = vmatpush1.msra.mxu0 0.0
        %637 = vmatprep.subr.mxu0 0.0
        %638 = vmatpush1.msra.mxu0 0.0
        %639 = vmatprep.subr.mxu0 0.0
        %640 = vmatpush1.msra.mxu0 0.0
        %641 = vmatprep.subr.mxu0 0.0
        %642 = vmatpush1.msra.mxu0 0.0
        %643 = vmatprep.subr.mxu0 0.0
        %644 = vmatpush1.msra.mxu0 0.0
        %645 = vmatprep.subr.mxu0 0.0
        %646 = vmatpush1.msra.mxu0 0.0
        %647 = vmatprep.subr.mxu0 0.0
        %648 = vmatpush1.msra.mxu0 0.0
        %649 = vmatprep.subr.mxu0 0.0
        %650 = vmatpush1.msra.mxu0 0.0
        %651 = vmatprep.subr.mxu0 0.0
        %652 = vmatpush1.msra.mxu0 0.0
        %653 = vmatprep.subr.mxu0 0.0
        %654 = vmatpush1.msra.mxu0 0.0
        %655 = vmatprep.subr.mxu0 0.0
        %656 = vmatpush1.msra.mxu0 0.0
        %657 = vmatprep.subr.mxu0 0.0
        %658 = vmatpush1.msra.mxu0 0.0
        %659 = vmatprep.subr.mxu0 0.0
        %660 = vmatpush1.msra.mxu0 0.0
        %661 = vmatprep.subr.mxu0 0.0
        %662 = vmatpush1.msra.mxu0 0.0
        %663 = vmatprep.subr.mxu0 0.0
        %664 = vmatpush1.msra.mxu0 0.0
        %665 = vmatprep.subr.mxu0 0.0
        %666 = vmatpush1.msra.mxu0 0.0
        %667 = vmatprep.subr.mxu0 0.0
        %668 = vmatpush1.msra.mxu0 0.0
        %669 = vmatprep.subr.mxu0 0.0
        %670 = vmatpush1.msra.mxu0 0.0
        %671 = vmatprep.subr.mxu0 0.0
        %672 = vmatpush1.msra.mxu0 0.0
        %673 = vmatprep.subr.mxu0 0.0
        %674 = vmatpush1.msra.mxu0 0.0
        %675 = vmatprep.subr.mxu0 0.0
        %676 = vmatpush1.msra.mxu0 0.0
        %677 = vmatprep.subr.mxu0 0.0
        %678 = vmatpush1.msra.mxu0 0.0
        %679 = vmatprep.subr.mxu0 0.0
        %680 = vmatpush1.msra.mxu0 0.0
        %681 = vmatprep.subr.mxu0 0.0
        %682 = vmatpush1.msra.mxu0 0.0
        %683 = vmatprep.subr.mxu0 0.0
        %684 = vmatpush1.msra.mxu0 0.0
        %685 = vmatprep.mubr.f32.mxu0 0.0
        %686 = vmatmul.mubr.f32.gmra.mrb[0].mxu0 %v548
        %v687 = vpop.f32.mrb[0].mxu0
        %v688 = vadd.f32 0.0, %v687
        %v689 = vpop.f32.mrb[0].mxu0
        %690 = vdwg.mxu0
        %v691 = vadd.f32 %v459, %v617
        %v692 = vadd.f32 %v461, %v619
        %v693 = vadd.f32 %v530, %v688
        %s694 = scalar_lea.vmem %s1, 24
        %v695 = vld [vmem:[%s694] sm:$0xff]
        %696 = vrot.lane.b32.xlu0 %v223, 110
        %v697 = vpop.permute.xlu0 %696
        %698 = vrot.lane.b32.xlu0 %v224, 110
        %v699 = vpop.permute.xlu0 %698
        %700 = vrot.lane.b32.xlu0 %v225, 110
        %v701 = vpop.permute.xlu0 %700
        %vm702 = vcmask 900096
        %v703 = vsel %vm702, %v697, %v699
        %v704 = vsel %vm702, %v699, %v701
        %v709 = vsel %vm244, %v695, 0
        %711 = vmatprep.subr.mxu0 %v704
        %712 = vmatpush1.msra.mxu0 %v703
        %713 = vmatprep.subr.mxu0 0.0
        %714 = vmatpush1.msra.mxu0 0.0
        %715 = vmatprep.subr.mxu0 0.0
        %716 = vmatpush1.msra.mxu0 0.0
        %717 = vmatprep.subr.mxu0 0.0
        %718 = vmatpush1.msra.mxu0 0.0
        %719 = vmatprep.subr.mxu0 0.0
        %720 = vmatpush1.msra.mxu0 0.0
        %721 = vmatprep.subr.mxu0 0.0
        %722 = vmatpush1.msra.mxu0 0.0
        %723 = vmatprep.subr.mxu0 0.0
        %724 = vmatpush1.msra.mxu0 0.0
        %725 = vmatprep.subr.mxu0 0.0
        %726 = vmatpush1.msra.mxu0 0.0
        %727 = vmatprep.subr.mxu0 0.0
        %728 = vmatpush1.msra.mxu0 0.0
        %729 = vmatprep.subr.mxu0 0.0
        %730 = vmatpush1.msra.mxu0 0.0
        %731 = vmatprep.subr.mxu0 0.0
        %732 = vmatpush1.msra.mxu0 0.0
        %733 = vmatprep.subr.mxu0 0.0
        %734 = vmatpush1.msra.mxu0 0.0
        %735 = vmatprep.subr.mxu0 0.0
        %736 = vmatpush1.msra.mxu0 0.0
        %737 = vmatprep.subr.mxu0 0.0
        %738 = vmatpush1.msra.mxu0 0.0
        %739 = vmatprep.subr.mxu0 0.0
        %740 = vmatpush1.msra.mxu0 0.0
        %741 = vmatprep.subr.mxu0 0.0
        %742 = vmatpush1.msra.mxu0 0.0
        %743 = vmatprep.subr.mxu0 0.0
        %744 = vmatpush1.msra.mxu0 0.0
        %745 = vmatprep.subr.mxu0 0.0
        %746 = vmatpush1.msra.mxu0 0.0
        %747 = vmatprep.subr.mxu0 0.0
        %748 = vmatpush1.msra.mxu0 0.0
        %749 = vmatprep.subr.mxu0 0.0
        %750 = vmatpush1.msra.mxu0 0.0
        %751 = vmatprep.subr.mxu0 0.0
        %752 = vmatpush1.msra.mxu0 0.0
        %753 = vmatprep.subr.mxu0 0.0
        %754 = vmatpush1.msra.mxu0 0.0
        %755 = vmatprep.subr.mxu0 0.0
        %756 = vmatpush1.msra.mxu0 0.0
        %757 = vmatprep.subr.mxu0 0.0
        %758 = vmatpush1.msra.mxu0 0.0
        %759 = vmatprep.subr.mxu0 0.0
        %760 = vmatpush1.msra.mxu0 0.0
        %761 = vmatprep.subr.mxu0 0.0
        %762 = vmatpush1.msra.mxu0 0.0
        %763 = vmatprep.subr.mxu0 0.0
        %764 = vmatpush1.msra.mxu0 0.0
        %765 = vmatprep.subr.mxu0 0.0
        %766 = vmatpush1.msra.mxu0 0.0
        %767 = vmatprep.subr.mxu0 0.0
        %768 = vmatpush1.msra.mxu0 0.0
        %769 = vmatprep.subr.mxu0 0.0
        %770 = vmatpush1.msra.mxu0 0.0
        %771 = vmatprep.subr.mxu0 0.0
        %772 = vmatpush1.msra.mxu0 0.0
        %773 = vmatprep.subr.mxu0 0.0
        %774 = vmatpush1.msra.mxu0 0.0
        %775 = vmatprep.mubr.f32.mxu0 0.0
        %776 = vmatmul.mubr.f32.gmra.mrb[0].mxu0 %v709
        %v777 = vpop.f32.mrb[0].mxu0
        %v778 = vadd.f32 0.0, %v777
        %v779 = vpop.f32.mrb[0].mxu0
        %v780 = vadd.f32 0.0, %v779
        %781 = vdwg.mxu0
        %782 = vmatprep.subr.mxu0 0.0
        %783 = vmatpush1.msra.mxu0 %v701
        %784 = vmatprep.subr.mxu0 0.0
        %785 = vmatpush1.msra.mxu0 0.0
        %786 = vmatprep.subr.mxu0 0.0
        %787 = vmatpush1.msra.mxu0 0.0
        %788 = vmatprep.subr.mxu0 0.0
        %789 = vmatpush1.msra.mxu0 0.0
        %790 = vmatprep.subr.mxu0 0.0
        %791 = vmatpush1.msra.mxu0 0.0
        %792 = vmatprep.subr.mxu0 0.0
        %793 = vmatpush1.msra.mxu0 0.0
        %794 = vmatprep.subr.mxu0 0.0
        %795 = vmatpush1.msra.mxu0 0.0
        %796 = vmatprep.subr.mxu0 0.0
        %797 = vmatpush1.msra.mxu0 0.0
        %798 = vmatprep.subr.mxu0 0.0
        %799 = vmatpush1.msra.mxu0 0.0
        %800 = vmatprep.subr.mxu0 0.0
        %801 = vmatpush1.msra.mxu0 0.0
        %802 = vmatprep.subr.mxu0 0.0
        %803 = vmatpush1.msra.mxu0 0.0
        %804 = vmatprep.subr.mxu0 0.0
        %805 = vmatpush1.msra.mxu0 0.0
        %806 = vmatprep.subr.mxu0 0.0
        %807 = vmatpush1.msra.mxu0 0.0
        %808 = vmatprep.subr.mxu0 0.0
        %809 = vmatpush1.msra.mxu0 0.0
        %810 = vmatprep.subr.mxu0 0.0
        %811 = vmatpush1.msra.mxu0 0.0
        %812 = vmatprep.subr.mxu0 0.0
        %813 = vmatpush1.msra.mxu0 0.0
        %814 = vmatprep.subr.mxu0 0.0
        %815 = vmatpush1.msra.mxu0 0.0
        %816 = vmatprep.subr.mxu0 0.0
        %817 = vmatpush1.msra.mxu0 0.0
        %818 = vmatprep.subr.mxu0 0.0
        %819 = vmatpush1.msra.mxu0 0.0
        %820 = vmatprep.subr.mxu0 0.0
        %821 = vmatpush1.msra.mxu0 0.0
        %822 = vmatprep.subr.mxu0 0.0
        %823 = vmatpush1.msra.mxu0 0.0
        %824 = vmatprep.subr.mxu0 0.0
        %825 = vmatpush1.msra.mxu0 0.0
        %826 = vmatprep.subr.mxu0 0.0
        %827 = vmatpush1.msra.mxu0 0.0
        %828 = vmatprep.subr.mxu0 0.0
        %829 = vmatpush1.msra.mxu0 0.0
        %830 = vmatprep.subr.mxu0 0.0
        %831 = vmatpush1.msra.mxu0 0.0
        %832 = vmatprep.subr.mxu0 0.0
        %833 = vmatpush1.msra.mxu0 0.0
        %834 = vmatprep.subr.mxu0 0.0
        %835 = vmatpush1.msra.mxu0 0.0
        %836 = vmatprep.subr.mxu0 0.0
        %837 = vmatpush1.msra.mxu0 0.0
        %838 = vmatprep.subr.mxu0 0.0
        %839 = vmatpush1.msra.mxu0 0.0
        %840 = vmatprep.subr.mxu0 0.0
        %841 = vmatpush1.msra.mxu0 0.0
        %842 = vmatprep.subr.mxu0 0.0
        %843 = vmatpush1.msra.mxu0 0.0
        %844 = vmatprep.subr.mxu0 0.0
        %845 = vmatpush1.msra.mxu0 0.0
        %846 = vmatprep.mubr.f32.mxu0 0.0
        %847 = vmatmul.mubr.f32.gmra.mrb[0].mxu0 %v709
        %v848 = vpop.f32.mrb[0].mxu0
        %v849 = vadd.f32 0.0, %v848
        %v850 = vpop.f32.mrb[0].mxu0
        %851 = vdwg.mxu0
        %v852 = vadd.f32 %v691, %v778
        %v853 = vadd.f32 %v692, %v780
        %v854 = vadd.f32 %v693, %v849
        %s855 = scalar_lea.vmem %s1, 32
        %v856 = vld [vmem:[%s855] sm:$0xff]
        %857 = vrot.lane.b32.xlu0 %v223, 109
        %v858 = vpop.permute.xlu0 %857
        %859 = vrot.lane.b32.xlu0 %v224, 109
        %v860 = vpop.permute.xlu0 %859
        %861 = vrot.lane.b32.xlu0 %v225, 109
        %v862 = vpop.permute.xlu0 %861
        %vm863 = vcmask 891904
        %v864 = vsel %vm863, %v858, %v860
        %v865 = vsel %vm863, %v860, %v862
        %v870 = vsel %vm244, %v856, 0
        %872 = vmatprep.subr.mxu0 %v865
        %873 = vmatpush1.msra.mxu0 %v864
        %874 = vmatprep.subr.mxu0 0.0
        %875 = vmatpush1.msra.mxu0 0.0
        %876 = vmatprep.subr.mxu0 0.0
        %877 = vmatpush1.msra.mxu0 0.0
        %878 = vmatprep.subr.mxu0 0.0
        %879 = vmatpush1.msra.mxu0 0.0
        %880 = vmatprep.subr.mxu0 0.0
        %881 = vmatpush1.msra.mxu0 0.0
        %882 = vmatprep.subr.mxu0 0.0
        %883 = vmatpush1.msra.mxu0 0.0
        %884 = vmatprep.subr.mxu0 0.0
        %885 = vmatpush1.msra.mxu0 0.0
        %886 = vmatprep.subr.mxu0 0.0
        %887 = vmatpush1.msra.mxu0 0.0
        %888 = vmatprep.subr.mxu0 0.0
        %889 = vmatpush1.msra.mxu0 0.0
        %890 = vmatprep.subr.mxu0 0.0
        %891 = vmatpush1.msra.mxu0 0.0
        %892 = vmatprep.subr.mxu0 0.0
        %893 = vmatpush1.msra.mxu0 0.0
        %894 = vmatprep.subr.mxu0 0.0
        %895 = vmatpush1.msra.mxu0 0.0
        %896 = vmatprep.subr.mxu0 0.0
        %897 = vmatpush1.msra.mxu0 0.0
        %898 = vmatprep.subr.mxu0 0.0
        %899 = vmatpush1.msra.mxu0 0.0
        %900 = vmatprep.subr.mxu0 0.0
        %901 = vmatpush1.msra.mxu0 0.0
        %902 = vmatprep.subr.mxu0 0.0
        %903 = vmatpush1.msra.mxu0 0.0
        %904 = vmatprep.subr.mxu0 0.0
        %905 = vmatpush1.msra.mxu0 0.0
        %906 = vmatprep.subr.mxu0 0.0
        %907 = vmatpush1.msra.mxu0 0.0
        %908 = vmatprep.subr.mxu0 0.0
        %909 = vmatpush1.msra.mxu0 0.0
        %910 = vmatprep.subr.mxu0 0.0
        %911 = vmatpush1.msra.mxu0 0.0
        %912 = vmatprep.subr.mxu0 0.0
        %913 = vmatpush1.msra.mxu0 0.0
        %914 = vmatprep.subr.mxu0 0.0
        %915 = vmatpush1.msra.mxu0 0.0
        %916 = vmatprep.subr.mxu0 0.0
        %917 = vmatpush1.msra.mxu0 0.0
        %918 = vmatprep.subr.mxu0 0.0
        %919 = vmatpush1.msra.mxu0 0.0
        %920 = vmatprep.subr.mxu0 0.0
        %921 = vmatpush1.msra.mxu0 0.0
        %922 = vmatprep.subr.mxu0 0.0
        %923 = vmatpush1.msra.mxu0 0.0
        %924 = vmatprep.subr.mxu0 0.0
        %925 = vmatpush1.msra.mxu0 0.0
        %926 = vmatprep.subr.mxu0 0.0
        %927 = vmatpush1.msra.mxu0 0.0
        %928 = vmatprep.subr.mxu0 0.0
        %929 = vmatpush1.msra.mxu0 0.0
        %930 = vmatprep.subr.mxu0 0.0
        %931 = vmatpush1.msra.mxu0 0.0
        %932 = vmatprep.subr.mxu0 0.0
        %933 = vmatpush1.msra.mxu0 0.0
        %934 = vmatprep.subr.mxu0 0.0
        %935 = vmatpush1.msra.mxu0 0.0
        %936 = vmatprep.mubr.f32.mxu0 0.0
        %937 = vmatmul.mubr.f32.gmra.mrb[0].mxu0 %v870
        %v938 = vpop.f32.mrb[0].mxu0
        %v939 = vadd.f32 0.0, %v938
        %v940 = vpop.f32.mrb[0].mxu0
        %v941 = vadd.f32 0.0, %v940
        %942 = vdwg.mxu0
        %943 = vmatprep.subr.mxu0 0.0
        %944 = vmatpush1.msra.mxu0 %v862
        %945 = vmatprep.subr.mxu0 0.0
        %946 = vmatpush1.msra.mxu0 0.0
        %947 = vmatprep.subr.mxu0 0.0
        %948 = vmatpush1.msra.mxu0 0.0
        %949 = vmatprep.subr.mxu0 0.0
        %950 = vmatpush1.msra.mxu0 0.0
        %951 = vmatprep.subr.mxu0 0.0
        %952 = vmatpush1.msra.mxu0 0.0
        %953 = vmatprep.subr.mxu0 0.0
        %954 = vmatpush1.msra.mxu0 0.0
        %955 = vmatprep.subr.mxu0 0.0
        %956 = vmatpush1.msra.mxu0 0.0
        %957 = vmatprep.subr.mxu0 0.0
        %958 = vmatpush1.msra.mxu0 0.0
        %959 = vmatprep.subr.mxu0 0.0
        %960 = vmatpush1.msra.mxu0 0.0
        %961 = vmatprep.subr.mxu0 0.0
        %962 = vmatpush1.msra.mxu0 0.0
        %963 = vmatprep.subr.mxu0 0.0
        %964 = vmatpush1.msra.mxu0 0.0
        %965 = vmatprep.subr.mxu0 0.0
        %966 = vmatpush1.msra.mxu0 0.0
        %967 = vmatprep.subr.mxu0 0.0
        %968 = vmatpush1.msra.mxu0 0.0
        %969 = vmatprep.subr.mxu0 0.0
        %970 = vmatpush1.msra.mxu0 0.0
        %971 = vmatprep.subr.mxu0 0.0
        %972 = vmatpush1.msra.mxu0 0.0
        %973 = vmatprep.subr.mxu0 0.0
        %974 = vmatpush1.msra.mxu0 0.0
        %975 = vmatprep.subr.mxu0 0.0
        %976 = vmatpush1.msra.mxu0 0.0
        %977 = vmatprep.subr.mxu0 0.0
        %978 = vmatpush1.msra.mxu0 0.0
        %979 = vmatprep.subr.mxu0 0.0
        %980 = vmatpush1.msra.mxu0 0.0
        %981 = vmatprep.subr.mxu0 0.0
        %982 = vmatpush1.msra.mxu0 0.0
        %983 = vmatprep.subr.mxu0 0.0
        %984 = vmatpush1.msra.mxu0 0.0
        %985 = vmatprep.subr.mxu0 0.0
        %986 = vmatpush1.msra.mxu0 0.0
        %987 = vmatprep.subr.mxu0 0.0
        %988 = vmatpush1.msra.mxu0 0.0
        %989 = vmatprep.subr.mxu0 0.0
        %990 = vmatpush1.msra.mxu0 0.0
        %991 = vmatprep.subr.mxu0 0.0
        %992 = vmatpush1.msra.mxu0 0.0
        %993 = vmatprep.subr.mxu0 0.0
        %994 = vmatpush1.msra.mxu0 0.0
        %995 = vmatprep.subr.mxu0 0.0
        %996 = vmatpush1.msra.mxu0 0.0
        %997 = vmatprep.subr.mxu0 0.0
        %998 = vmatpush1.msra.mxu0 0.0
        %999 = vmatprep.subr.mxu0 0.0
        %1000 = vmatpush1.msra.mxu0 0.0
        %1001 = vmatprep.subr.mxu0 0.0
        %1002 = vmatpush1.msra.mxu0 0.0
        %1003 = vmatprep.subr.mxu0 0.0
        %1004 = vmatpush1.msra.mxu0 0.0
        %1005 = vmatprep.subr.mxu0 0.0
        %1006 = vmatpush1.msra.mxu0 0.0
        %1007 = vmatprep.mubr.f32.mxu0 0.0
        %1008 = vmatmul.mubr.f32.gmra.mrb[0].mxu0 %v870
        %v1009 = vpop.f32.mrb[0].mxu0
        %v1010 = vadd.f32 0.0, %v1009
        %v1011 = vpop.f32.mrb[0].mxu0
        %1012 = vdwg.mxu0
        %v1013 = vadd.f32 %v852, %v939
        %v1014 = vadd.f32 %v853, %v941
        %v1015 = vadd.f32 %v854, %v1010
        %s1016 = scalar_lea.vmem %s1, 40
        %v1017 = vld [vmem:[%s1016] sm:$0xff]
        %1018 = vrot.lane.b32.xlu0 %v223, 108
        %v1019 = vpop.permute.xlu0 %1018
        %1020 = vrot.lane.b32.xlu0 %v224, 108
        %v1021 = vpop.permute.xlu0 %1020
        %1022 = vrot.lane.b32.xlu0 %v225, 108
        %v1023 = vpop.permute.xlu0 %1022
        %vm1024 = vcmask 883712
        %v1025 = vsel %vm1024, %v1019, %v1021
        %v1026 = vsel %vm1024, %v1021, %v1023
        %v1031 = vsel %vm244, %v1017, 0
        %1033 = vmatprep.subr.mxu0 %v1026
        %1034 = vmatpush1.msra.mxu0 %v1025
        %1035 = vmatprep.subr.mxu0 0.0
        %1036 = vmatpush1.msra.mxu0 0.0
        %1037 = vmatprep.subr.mxu0 0.0
        %1038 = vmatpush1.msra.mxu0 0.0
        %1039 = vmatprep.subr.mxu0 0.0
        %1040 = vmatpush1.msra.mxu0 0.0
        %1041 = vmatprep.subr.mxu0 0.0
        %1042 = vmatpush1.msra.mxu0 0.0
        %1043 = vmatprep.subr.mxu0 0.0
        %1044 = vmatpush1.msra.mxu0 0.0
        %1045 = vmatprep.subr.mxu0 0.0
        %1046 = vmatpush1.msra.mxu0 0.0
        %1047 = vmatprep.subr.mxu0 0.0
        %1048 = vmatpush1.msra.mxu0 0.0
        %1049 = vmatprep.subr.mxu0 0.0
        %1050 = vmatpush1.msra.mxu0 0.0
        %1051 = vmatprep.subr.mxu0 0.0
        %1052 = vmatpush1.msra.mxu0 0.0
        %1053 = vmatprep.subr.mxu0 0.0
        %1054 = vmatpush1.msra.mxu0 0.0
        %1055 = vmatprep.subr.mxu0 0.0
        %1056 = vmatpush1.msra.mxu0 0.0
        %1057 = vmatprep.subr.mxu0 0.0
        %1058 = vmatpush1.msra.mxu0 0.0
        %1059 = vmatprep.subr.mxu0 0.0
        %1060 = vmatpush1.msra.mxu0 0.0
        %1061 = vmatprep.subr.mxu0 0.0
        %1062 = vmatpush1.msra.mxu0 0.0
        %1063 = vmatprep.subr.mxu0 0.0
        %1064 = vmatpush1.msra.mxu0 0.0
        %1065 = vmatprep.subr.mxu0 0.0
        %1066 = vmatpush1.msra.mxu0 0.0
        %1067 = vmatprep.subr.mxu0 0.0
        %1068 = vmatpush1.msra.mxu0 0.0
        %1069 = vmatprep.subr.mxu0 0.0
        %1070 = vmatpush1.msra.mxu0 0.0
        %1071 = vmatprep.subr.mxu0 0.0
        %1072 = vmatpush1.msra.mxu0 0.0
        %1073 = vmatprep.subr.mxu0 0.0
        %1074 = vmatpush1.msra.mxu0 0.0
        %1075 = vmatprep.subr.mxu0 0.0
        %1076 = vmatpush1.msra.mxu0 0.0
        %1077 = vmatprep.subr.mxu0 0.0
        %1078 = vmatpush1.msra.mxu0 0.0
        %1079 = vmatprep.subr.mxu0 0.0
        %1080 = vmatpush1.msra.mxu0 0.0
        %1081 = vmatprep.subr.mxu0 0.0
        %1082 = vmatpush1.msra.mxu0 0.0
        %1083 = vmatprep.subr.mxu0 0.0
        %1084 = vmatpush1.msra.mxu0 0.0
        %1085 = vmatprep.subr.mxu0 0.0
        %1086 = vmatpush1.msra.mxu0 0.0
        %1087 = vmatprep.subr.mxu0 0.0
        %1088 = vmatpush1.msra.mxu0 0.0
        %1089 = vmatprep.subr.mxu0 0.0
        %1090 = vmatpush1.msra.mxu0 0.0
        %1091 = vmatprep.subr.mxu0 0.0
        %1092 = vmatpush1.msra.mxu0 0.0
        %1093 = vmatprep.subr.mxu0 0.0
        %1094 = vmatpush1.msra.mxu0 0.0
        %1095 = vmatprep.subr.mxu0 0.0
        %1096 = vmatpush1.msra.mxu0 0.0
        %1097 = vmatprep.mubr.f32.mxu0 0.0
        %1098 = vmatmul.mubr.f32.gmra.mrb[0].mxu0 %v1031
        %v1099 = vpop.f32.mrb[0].mxu0
        %v1100 = vadd.f32 0.0, %v1099
        %v1101 = vpop.f32.mrb[0].mxu0
        %v1102 = vadd.f32 0.0, %v1101
        %1103 = vdwg.mxu0
        %1104 = vmatprep.subr.mxu0 0.0
        %1105 = vmatpush1.msra.mxu0 %v1023
        %1106 = vmatprep.subr.mxu0 0.0
        %1107 = vmatpush1.msra.mxu0 0.0
        %1108 = vmatprep.subr.mxu0 0.0
        %1109 = vmatpush1.msra.mxu0 0.0
        %1110 = vmatprep.subr.mxu0 0.0
        %1111 = vmatpush1.msra.mxu0 0.0
        %1112 = vmatprep.subr.mxu0 0.0
        %1113 = vmatpush1.msra.mxu0 0.0
        %1114 = vmatprep.subr.mxu0 0.0
        %1115 = vmatpush1.msra.mxu0 0.0
        %1116 = vmatprep.subr.mxu0 0.0
        %1117 = vmatpush1.msra.mxu0 0.0
        %1118 = vmatprep.subr.mxu0 0.0
        %1119 = vmatpush1.msra.mxu0 0.0
        %1120 = vmatprep.subr.mxu0 0.0
        %1121 = vmatpush1.msra.mxu0 0.0
        %1122 = vmatprep.subr.mxu0 0.0
        %1123 = vmatpush1.msra.mxu0 0.0
        %1124 = vmatprep.subr.mxu0 0.0
        %1125 = vmatpush1.msra.mxu0 0.0
        %1126 = vmatprep.subr.mxu0 0.0
        %1127 = vmatpush1.msra.mxu0 0.0
        %1128 = vmatprep.subr.mxu0 0.0
        %1129 = vmatpush1.msra.mxu0 0.0
        %1130 = vmatprep.subr.mxu0 0.0
        %1131 = vmatpush1.msra.mxu0 0.0
        %1132 = vmatprep.subr.mxu0 0.0
        %1133 = vmatpush1.msra.mxu0 0.0
        %1134 = vmatprep.subr.mxu0 0.0
        %1135 = vmatpush1.msra.mxu0 0.0
        %1136 = vmatprep.subr.mxu0 0.0
        %1137 = vmatpush1.msra.mxu0 0.0
        %1138 = vmatprep.subr.mxu0 0.0
        %1139 = vmatpush1.msra.mxu0 0.0
        %1140 = vmatprep.subr.mxu0 0.0
        %1141 = vmatpush1.msra.mxu0 0.0
        %1142 = vmatprep.subr.mxu0 0.0
        %1143 = vmatpush1.msra.mxu0 0.0
        %1144 = vmatprep.subr.mxu0 0.0
        %1145 = vmatpush1.msra.mxu0 0.0
        %1146 = vmatprep.subr.mxu0 0.0
        %1147 = vmatpush1.msra.mxu0 0.0
        %1148 = vmatprep.subr.mxu0 0.0
        %1149 = vmatpush1.msra.mxu0 0.0
        %1150 = vmatprep.subr.mxu0 0.0
        %1151 = vmatpush1.msra.mxu0 0.0
        %1152 = vmatprep.subr.mxu0 0.0
        %1153 = vmatpush1.msra.mxu0 0.0
        %1154 = vmatprep.subr.mxu0 0.0
        %1155 = vmatpush1.msra.mxu0 0.0
        %1156 = vmatprep.subr.mxu0 0.0
        %1157 = vmatpush1.msra.mxu0 0.0
        %1158 = vmatprep.subr.mxu0 0.0
        %1159 = vmatpush1.msra.mxu0 0.0
        %1160 = vmatprep.subr.mxu0 0.0
        %1161 = vmatpush1.msra.mxu0 0.0
        %1162 = vmatprep.subr.mxu0 0.0
        %1163 = vmatpush1.msra.mxu0 0.0
        %1164 = vmatprep.subr.mxu0 0.0
        %1165 = vmatpush1.msra.mxu0 0.0
        %1166 = vmatprep.subr.mxu0 0.0
        %1167 = vmatpush1.msra.mxu0 0.0
        %1168 = vmatprep.mubr.f32.mxu0 0.0
        %1169 = vmatmul.mubr.f32.gmra.mrb[0].mxu0 %v1031
        %v1170 = vpop.f32.mrb[0].mxu0
        %v1171 = vadd.f32 0.0, %v1170
        %v1172 = vpop.f32.mrb[0].mxu0
        %1173 = vdwg.mxu0
        %v1174 = vadd.f32 %v1013, %v1100
        %v1175 = vadd.f32 %v1014, %v1102
        %v1176 = vadd.f32 %v1015, %v1171
        %s1177 = scalar_lea.vmem %s1, 48
        %v1178 = vld [vmem:[%s1177] sm:$0xff]
        %1179 = vrot.lane.b32.xlu0 %v223, 92
        %v1180 = vpop.permute.xlu0 %1179
        %1181 = vrot.lane.b32.xlu0 %v224, 92
        %v1182 = vpop.permute.xlu0 %1181
        %1183 = vrot.lane.b32.xlu0 %v225, 92
        %v1184 = vpop.permute.xlu0 %1183
        %vm1185 = vcmask 752640
        %v1186 = vsel %vm1185, %v1180, %v1182
        %v1187 = vsel %vm1185, %v1182, %v1184
        %v1192 = vsel %vm244, %v1178, 0
        %1194 = vmatprep.subr.mxu0 %v1187
        %1195 = vmatpush1.msra.mxu0 %v1186
        %1196 = vmatprep.subr.mxu0 0.0
        %1197 = vmatpush1.msra.mxu0 0.0
        %1198 = vmatprep.subr.mxu0 0.0
        %1199 = vmatpush1.msra.mxu0 0.0
        %1200 = vmatprep.subr.mxu0 0.0
        %1201 = vmatpush1.msra.mxu0 0.0
        %1202 = vmatprep.subr.mxu0 0.0
        %1203 = vmatpush1.msra.mxu0 0.0
        %1204 = vmatprep.subr.mxu0 0.0
        %1205 = vmatpush1.msra.mxu0 0.0
        %1206 = vmatprep.subr.mxu0 0.0
        %1207 = vmatpush1.msra.mxu0 0.0
        %1208 = vmatprep.subr.mxu0 0.0
        %1209 = vmatpush1.msra.mxu0 0.0
        %1210 = vmatprep.subr.mxu0 0.0
        %1211 = vmatpush1.msra.mxu0 0.0
        %1212 = vmatprep.subr.mxu0 0.0
        %1213 = vmatpush1.msra.mxu0 0.0
        %1214 = vmatprep.subr.mxu0 0.0
        %1215 = vmatpush1.msra.mxu0 0.0
        %1216 = vmatprep.subr.mxu0 0.0
        %1217 = vmatpush1.msra.mxu0 0.0
        %1218 = vmatprep.subr.mxu0 0.0
        %1219 = vmatpush1.msra.mxu0 0.0
        %1220 = vmatprep.subr.mxu0 0.0
        %1221 = vmatpush1.msra.mxu0 0.0
        %1222 = vmatprep.subr.mxu0 0.0
        %1223 = vmatpush1.msra.mxu0 0.0
        %1224 = vmatprep.subr.mxu0 0.0
        %1225 = vmatpush1.msra.mxu0 0.0
        %1226 = vmatprep.subr.mxu0 0.0
        %1227 = vmatpush1.msra.mxu0 0.0
        %1228 = vmatprep.subr.mxu0 0.0
        %1229 = vmatpush1.msra.mxu0 0.0
        %1230 = vmatprep.subr.mxu0 0.0
        %1231 = vmatpush1.msra.mxu0 0.0
        %1232 = vmatprep.subr.mxu0 0.0
        %1233 = vmatpush1.msra.mxu0 0.0
        %1234 = vmatprep.subr.mxu0 0.0
        %1235 = vmatpush1.msra.mxu0 0.0
        %1236 = vmatprep.subr.mxu0 0.0
        %1237 = vmatpush1.msra.mxu0 0.0
        %1238 = vmatprep.subr.mxu0 0.0
        %1239 = vmatpush1.msra.mxu0 0.0
        %1240 = vmatprep.subr.mxu0 0.0
        %1241 = vmatpush1.msra.mxu0 0.0
        %1242 = vmatprep.subr.mxu0 0.0
        %1243 = vmatpush1.msra.mxu0 0.0
        %1244 = vmatprep.subr.mxu0 0.0
        %1245 = vmatpush1.msra.mxu0 0.0
        %1246 = vmatprep.subr.mxu0 0.0
        %1247 = vmatpush1.msra.mxu0 0.0
        %1248 = vmatprep.subr.mxu0 0.0
        %1249 = vmatpush1.msra.mxu0 0.0
        %1250 = vmatprep.subr.mxu0 0.0
        %1251 = vmatpush1.msra.mxu0 0.0
        %1252 = vmatprep.subr.mxu0 0.0
        %1253 = vmatpush1.msra.mxu0 0.0
        %1254 = vmatprep.subr.mxu0 0.0
        %1255 = vmatpush1.msra.mxu0 0.0
        %1256 = vmatprep.subr.mxu0 0.0
        %1257 = vmatpush1.msra.mxu0 0.0
        %1258 = vmatprep.mubr.f32.mxu0 0.0
        %1259 = vmatmul.mubr.f32.gmra.mrb[0].mxu0 %v1192
        %v1260 = vpop.f32.mrb[0].mxu0
        %v1261 = vadd.f32 0.0, %v1260
        %v1262 = vpop.f32.mrb[0].mxu0
        %v1263 = vadd.f32 0.0, %v1262
        %1264 = vdwg.mxu0
        %1265 = vmatprep.subr.mxu0 0.0
        %1266 = vmatpush1.msra.mxu0 %v1184
        %1267 = vmatprep.subr.mxu0 0.0
        %1268 = vmatpush1.msra.mxu0 0.0
        %1269 = vmatprep.subr.mxu0 0.0
        %1270 = vmatpush1.msra.mxu0 0.0
        %1271 = vmatprep.subr.mxu0 0.0
        %1272 = vmatpush1.msra.mxu0 0.0
        %1273 = vmatprep.subr.mxu0 0.0
        %1274 = vmatpush1.msra.mxu0 0.0
        %1275 = vmatprep.subr.mxu0 0.0
        %1276 = vmatpush1.msra.mxu0 0.0
        %1277 = vmatprep.subr.mxu0 0.0
        %1278 = vmatpush1.msra.mxu0 0.0
        %1279 = vmatprep.subr.mxu0 0.0
        %1280 = vmatpush1.msra.mxu0 0.0
        %1281 = vmatprep.subr.mxu0 0.0
        %1282 = vmatpush1.msra.mxu0 0.0
        %1283 = vmatprep.subr.mxu0 0.0
        %1284 = vmatpush1.msra.mxu0 0.0
        %1285 = vmatprep.subr.mxu0 0.0
        %1286 = vmatpush1.msra.mxu0 0.0
        %1287 = vmatprep.subr.mxu0 0.0
        %1288 = vmatpush1.msra.mxu0 0.0
        %1289 = vmatprep.subr.mxu0 0.0
        %1290 = vmatpush1.msra.mxu0 0.0
        %1291 = vmatprep.subr.mxu0 0.0
        %1292 = vmatpush1.msra.mxu0 0.0
        %1293 = vmatprep.subr.mxu0 0.0
        %1294 = vmatpush1.msra.mxu0 0.0
        %1295 = vmatprep.subr.mxu0 0.0
        %1296 = vmatpush1.msra.mxu0 0.0
        %1297 = vmatprep.subr.mxu0 0.0
        %1298 = vmatpush1.msra.mxu0 0.0
        %1299 = vmatprep.subr.mxu0 0.0
        %1300 = vmatpush1.msra.mxu0 0.0
        %1301 = vmatprep.subr.mxu0 0.0
        %1302 = vmatpush1.msra.mxu0 0.0
        %1303 = vmatprep.subr.mxu0 0.0
        %1304 = vmatpush1.msra.mxu0 0.0
        %1305 = vmatprep.subr.mxu0 0.0
        %1306 = vmatpush1.msra.mxu0 0.0
        %1307 = vmatprep.subr.mxu0 0.0
        %1308 = vmatpush1.msra.mxu0 0.0
        %1309 = vmatprep.subr.mxu0 0.0
        %1310 = vmatpush1.msra.mxu0 0.0
        %1311 = vmatprep.subr.mxu0 0.0
        %1312 = vmatpush1.msra.mxu0 0.0
        %1313 = vmatprep.subr.mxu0 0.0
        %1314 = vmatpush1.msra.mxu0 0.0
        %1315 = vmatprep.subr.mxu0 0.0
        %1316 = vmatpush1.msra.mxu0 0.0
        %1317 = vmatprep.subr.mxu0 0.0
        %1318 = vmatpush1.msra.mxu0 0.0
        %1319 = vmatprep.subr.mxu0 0.0
        %1320 = vmatpush1.msra.mxu0 0.0
        %1321 = vmatprep.subr.mxu0 0.0
        %1322 = vmatpush1.msra.mxu0 0.0
        %1323 = vmatprep.subr.mxu0 0.0
        %1324 = vmatpush1.msra.mxu0 0.0
        %1325 = vmatprep.subr.mxu0 0.0
        %1326 = vmatpush1.msra.mxu0 0.0
        %1327 = vmatprep.subr.mxu0 0.0
        %1328 = vmatpush1.msra.mxu0 0.0
        %1329 = vmatprep.mubr.f32.mxu0 0.0
        %1330 = vmatmul.mubr.f32.gmra.mrb[0].mxu0 %v1192
        %v1331 = vpop.f32.mrb[0].mxu0
        %v1332 = vadd.f32 0.0, %v1331
        %v1333 = vpop.f32.mrb[0].mxu0
        %1334 = vdwg.mxu0
        %v1335 = vadd.f32 %v1174, %v1261
        %v1336 = vadd.f32 %v1175, %v1263
        %v1337 = vadd.f32 %v1176, %v1332
        %s1338 = scalar_lea.vmem %s1, 56
        %v1339 = vld [vmem:[%s1338] sm:$0xff]
        %1340 = vrot.lane.b32.xlu0 %v223, 91
        %v1341 = vpop.permute.xlu0 %1340
        %1342 = vrot.lane.b32.xlu0 %v224, 91
        %v1343 = vpop.permute.xlu0 %1342
        %1344 = vrot.lane.b32.xlu0 %v225, 91
        %v1345 = vpop.permute.xlu0 %1344
        %vm1346 = vcmask 744448
        %v1347 = vsel %vm1346, %v1341, %v1343
        %v1348 = vsel %vm1346, %v1343, %v1345
        %v1353 = vsel %vm244, %v1339, 0
        %1355 = vmatprep.subr.mxu0 %v1348
        %1356 = vmatpush1.msra.mxu0 %v1347
        %1357 = vmatprep.subr.mxu0 0.0
        %1358 = vmatpush1.msra.mxu0 0.0
        %1359 = vmatprep.subr.mxu0 0.0
        %1360 = vmatpush1.msra.mxu0 0.0
        %1361 = vmatprep.subr.mxu0 0.0
        %1362 = vmatpush1.msra.mxu0 0.0
        %1363 = vmatprep.subr.mxu0 0.0
        %1364 = vmatpush1.msra.mxu0 0.0
        %1365 = vmatprep.subr.mxu0 0.0
        %1366 = vmatpush1.msra.mxu0 0.0
        %1367 = vmatprep.subr.mxu0 0.0
        %1368 = vmatpush1.msra.mxu0 0.0
        %1369 = vmatprep.subr.mxu0 0.0
        %1370 = vmatpush1.msra.mxu0 0.0
        %1371 = vmatprep.subr.mxu0 0.0
        %1372 = vmatpush1.msra.mxu0 0.0
        %1373 = vmatprep.subr.mxu0 0.0
        %1374 = vmatpush1.msra.mxu0 0.0
        %1375 = vmatprep.subr.mxu0 0.0
        %1376 = vmatpush1.msra.mxu0 0.0
        %1377 = vmatprep.subr.mxu0 0.0
        %1378 = vmatpush1.msra.mxu0 0.0
        %1379 = vmatprep.subr.mxu0 0.0
        %1380 = vmatpush1.msra.mxu0 0.0
        %1381 = vmatprep.subr.mxu0 0.0
        %1382 = vmatpush1.msra.mxu0 0.0
        %1383 = vmatprep.subr.mxu0 0.0
        %1384 = vmatpush1.msra.mxu0 0.0
        %1385 = vmatprep.subr.mxu0 0.0
        %1386 = vmatpush1.msra.mxu0 0.0
        %1387 = vmatprep.subr.mxu0 0.0
        %1388 = vmatpush1.msra.mxu0 0.0
        %1389 = vmatprep.subr.mxu0 0.0
        %1390 = vmatpush1.msra.mxu0 0.0
        %1391 = vmatprep.subr.mxu0 0.0
        %1392 = vmatpush1.msra.mxu0 0.0
        %1393 = vmatprep.subr.mxu0 0.0
        %1394 = vmatpush1.msra.mxu0 0.0
        %1395 = vmatprep.subr.mxu0 0.0
        %1396 = vmatpush1.msra.mxu0 0.0
        %1397 = vmatprep.subr.mxu0 0.0
        %1398 = vmatpush1.msra.mxu0 0.0
        %1399 = vmatprep.subr.mxu0 0.0
        %1400 = vmatpush1.msra.mxu0 0.0
        %1401 = vmatprep.subr.mxu0 0.0
        %1402 = vmatpush1.msra.mxu0 0.0
        %1403 = vmatprep.subr.mxu0 0.0
        %1404 = vmatpush1.msra.mxu0 0.0
        %1405 = vmatprep.subr.mxu0 0.0
        %1406 = vmatpush1.msra.mxu0 0.0
        %1407 = vmatprep.subr.mxu0 0.0
        %1408 = vmatpush1.msra.mxu0 0.0
        %1409 = vmatprep.subr.mxu0 0.0
        %1410 = vmatpush1.msra.mxu0 0.0
        %1411 = vmatprep.subr.mxu0 0.0
        %1412 = vmatpush1.msra.mxu0 0.0
        %1413 = vmatprep.subr.mxu0 0.0
        %1414 = vmatpush1.msra.mxu0 0.0
        %1415 = vmatprep.subr.mxu0 0.0
        %1416 = vmatpush1.msra.mxu0 0.0
        %1417 = vmatprep.subr.mxu0 0.0
        %1418 = vmatpush1.msra.mxu0 0.0
        %1419 = vmatprep.mubr.f32.mxu0 0.0
        %1420 = vmatmul.mubr.f32.gmra.mrb[0].mxu0 %v1353
        %v1421 = vpop.f32.mrb[0].mxu0
        %v1422 = vadd.f32 0.0, %v1421
        %v1423 = vpop.f32.mrb[0].mxu0
        %v1424 = vadd.f32 0.0, %v1423
        %1425 = vdwg.mxu0
        %1426 = vmatprep.subr.mxu0 0.0
        %1427 = vmatpush1.msra.mxu0 %v1345
        %1428 = vmatprep.subr.mxu0 0.0
        %1429 = vmatpush1.msra.mxu0 0.0
        %1430 = vmatprep.subr.mxu0 0.0
        %1431 = vmatpush1.msra.mxu0 0.0
        %1432 = vmatprep.subr.mxu0 0.0
        %1433 = vmatpush1.msra.mxu0 0.0
        %1434 = vmatprep.subr.mxu0 0.0
        %1435 = vmatpush1.msra.mxu0 0.0
        %1436 = vmatprep.subr.mxu0 0.0
        %1437 = vmatpush1.msra.mxu0 0.0
        %1438 = vmatprep.subr.mxu0 0.0
        %1439 = vmatpush1.msra.mxu0 0.0
        %1440 = vmatprep.subr.mxu0 0.0
        %1441 = vmatpush1.msra.mxu0 0.0
        %1442 = vmatprep.subr.mxu0 0.0
        %1443 = vmatpush1.msra.mxu0 0.0
        %1444 = vmatprep.subr.mxu0 0.0
        %1445 = vmatpush1.msra.mxu0 0.0
        %1446 = vmatprep.subr.mxu0 0.0
        %1447 = vmatpush1.msra.mxu0 0.0
        %1448 = vmatprep.subr.mxu0 0.0
        %1449 = vmatpush1.msra.mxu0 0.0
        %1450 = vmatprep.subr.mxu0 0.0
        %1451 = vmatpush1.msra.mxu0 0.0
        %1452 = vmatprep.subr.mxu0 0.0
        %1453 = vmatpush1.msra.mxu0 0.0
        %1454 = vmatprep.subr.mxu0 0.0
        %1455 = vmatpush1.msra.mxu0 0.0
        %1456 = vmatprep.subr.mxu0 0.0
        %1457 = vmatpush1.msra.mxu0 0.0
        %1458 = vmatprep.subr.mxu0 0.0
        %1459 = vmatpush1.msra.mxu0 0.0
        %1460 = vmatprep.subr.mxu0 0.0
        %1461 = vmatpush1.msra.mxu0 0.0
        %1462 = vmatprep.subr.mxu0 0.0
        %1463 = vmatpush1.msra.mxu0 0.0
        %1464 = vmatprep.subr.mxu0 0.0
        %1465 = vmatpush1.msra.mxu0 0.0
        %1466 = vmatprep.subr.mxu0 0.0
        %1467 = vmatpush1.msra.mxu0 0.0
        %1468 = vmatprep.subr.mxu0 0.0
        %1469 = vmatpush1.msra.mxu0 0.0
        %1470 = vmatprep.subr.mxu0 0.0
        %1471 = vmatpush1.msra.mxu0 0.0
        %1472 = vmatprep.subr.mxu0 0.0
        %1473 = vmatpush1.msra.mxu0 0.0
        %1474 = vmatprep.subr.mxu0 0.0
        %1475 = vmatpush1.msra.mxu0 0.0
        %1476 = vmatprep.subr.mxu0 0.0
        %1477 = vmatpush1.msra.mxu0 0.0
        %1478 = vmatprep.subr.mxu0 0.0
        %1479 = vmatpush1.msra.mxu0 0.0
        %1480 = vmatprep.subr.mxu0 0.0
        %1481 = vmatpush1.msra.mxu0 0.0
        %1482 = vmatprep.subr.mxu0 0.0
        %1483 = vmatpush1.msra.mxu0 0.0
        %1484 = vmatprep.subr.mxu0 0.0
        %1485 = vmatpush1.msra.mxu0 0.0
        %1486 = vmatprep.subr.mxu0 0.0
        %1487 = vmatpush1.msra.mxu0 0.0
        %1488 = vmatprep.subr.mxu0 0.0
        %1489 = vmatpush1.msra.mxu0 0.0
        %1490 = vmatprep.mubr.f32.mxu0 0.0
        %1491 = vmatmul.mubr.f32.gmra.mrb[0].mxu0 %v1353
        %v1492 = vpop.f32.mrb[0].mxu0
        %v1493 = vadd.f32 0.0, %v1492
        %v1494 = vpop.f32.mrb[0].mxu0
        %1495 = vdwg.mxu0
        %v1496 = vadd.f32 %v1335, %v1422
        %v1497 = vadd.f32 %v1336, %v1424
        %v1498 = vadd.f32 %v1337, %v1493
        %s1499 = scalar_lea.vmem %s1, 64
        %v1500 = vld [vmem:[%s1499] sm:$0xff]
        %1501 = vrot.lane.b32.xlu0 %v223, 90
        %v1502 = vpop.permute.xlu0 %1501
        %1503 = vrot.lane.b32.xlu0 %v224, 90
        %v1504 = vpop.permute.xlu0 %1503
        %1505 = vrot.lane.b32.xlu0 %v225, 90
        %v1506 = vpop.permute.xlu0 %1505
        %vm1507 = vcmask 736256
        %v1508 = vsel %vm1507, %v1502, %v1504
        %v1509 = vsel %vm1507, %v1504, %v1506
        %v1514 = vsel %vm244, %v1500, 0
        %1516 = vmatprep.subr.mxu0 %v1509
        %1517 = vmatpush1.msra.mxu0 %v1508
        %1518 = vmatprep.subr.mxu0 0.0
        %1519 = vmatpush1.msra.mxu0 0.0
        %1520 = vmatprep.subr.mxu0 0.0
        %1521 = vmatpush1.msra.mxu0 0.0
        %1522 = vmatprep.subr.mxu0 0.0
        %1523 = vmatpush1.msra.mxu0 0.0
        %1524 = vmatprep.subr.mxu0 0.0
        %1525 = vmatpush1.msra.mxu0 0.0
        %1526 = vmatprep.subr.mxu0 0.0
        %1527 = vmatpush1.msra.mxu0 0.0
        %1528 = vmatprep.subr.mxu0 0.0
        %1529 = vmatpush1.msra.mxu0 0.0
        %1530 = vmatprep.subr.mxu0 0.0
        %1531 = vmatpush1.msra.mxu0 0.0
        %1532 = vmatprep.subr.mxu0 0.0
        %1533 = vmatpush1.msra.mxu0 0.0
        %1534 = vmatprep.subr.mxu0 0.0
        %1535 = vmatpush1.msra.mxu0 0.0
        %1536 = vmatprep.subr.mxu0 0.0
        %1537 = vmatpush1.msra.mxu0 0.0
        %1538 = vmatprep.subr.mxu0 0.0
        %1539 = vmatpush1.msra.mxu0 0.0
        %1540 = vmatprep.subr.mxu0 0.0
        %1541 = vmatpush1.msra.mxu0 0.0
        %1542 = vmatprep.subr.mxu0 0.0
        %1543 = vmatpush1.msra.mxu0 0.0
        %1544 = vmatprep.subr.mxu0 0.0
        %1545 = vmatpush1.msra.mxu0 0.0
        %1546 = vmatprep.subr.mxu0 0.0
        %1547 = vmatpush1.msra.mxu0 0.0
        %1548 = vmatprep.subr.mxu0 0.0
        %1549 = vmatpush1.msra.mxu0 0.0
        %1550 = vmatprep.subr.mxu0 0.0
        %1551 = vmatpush1.msra.mxu0 0.0
        %1552 = vmatprep.subr.mxu0 0.0
        %1553 = vmatpush1.msra.mxu0 0.0
        %1554 = vmatprep.subr.mxu0 0.0
        %1555 = vmatpush1.msra.mxu0 0.0
        %1556 = vmatprep.subr.mxu0 0.0
        %1557 = vmatpush1.msra.mxu0 0.0
        %1558 = vmatprep.subr.mxu0 0.0
        %1559 = vmatpush1.msra.mxu0 0.0
        %1560 = vmatprep.subr.mxu0 0.0
        %1561 = vmatpush1.msra.mxu0 0.0
        %1562 = vmatprep.subr.mxu0 0.0
        %1563 = vmatpush1.msra.mxu0 0.0
        %1564 = vmatprep.subr.mxu0 0.0
        %1565 = vmatpush1.msra.mxu0 0.0
        %1566 = vmatprep.subr.mxu0 0.0
        %1567 = vmatpush1.msra.mxu0 0.0
        %1568 = vmatprep.subr.mxu0 0.0
        %1569 = vmatpush1.msra.mxu0 0.0
        %1570 = vmatprep.subr.mxu0 0.0
        %1571 = vmatpush1.msra.mxu0 0.0
        %1572 = vmatprep.subr.mxu0 0.0
        %1573 = vmatpush1.msra.mxu0 0.0
        %1574 = vmatprep.subr.mxu0 0.0
        %1575 = vmatpush1.msra.mxu0 0.0
        %1576 = vmatprep.subr.mxu0 0.0
        %1577 = vmatpush1.msra.mxu0 0.0
        %1578 = vmatprep.subr.mxu0 0.0
        %1579 = vmatpush1.msra.mxu0 0.0
        %1580 = vmatprep.mubr.f32.mxu0 0.0
        %1581 = vmatmul.mubr.f32.gmra.mrb[0].mxu0 %v1514
        %v1582 = vpop.f32.mrb[0].mxu0
        %v1583 = vadd.f32 0.0, %v1582
        %v1584 = vpop.f32.mrb[0].mxu0
        %v1585 = vadd.f32 0.0, %v1584
        %1586 = vdwg.mxu0
        %1587 = vmatprep.subr.mxu0 0.0
        %1588 = vmatpush1.msra.mxu0 %v1506
        %1589 = vmatprep.subr.mxu0 0.0
        %1590 = vmatpush1.msra.mxu0 0.0
        %1591 = vmatprep.subr.mxu0 0.0
        %1592 = vmatpush1.msra.mxu0 0.0
        %1593 = vmatprep.subr.mxu0 0.0
        %1594 = vmatpush1.msra.mxu0 0.0
        %1595 = vmatprep.subr.mxu0 0.0
        %1596 = vmatpush1.msra.mxu0 0.0
        %1597 = vmatprep.subr.mxu0 0.0
        %1598 = vmatpush1.msra.mxu0 0.0
        %1599 = vmatprep.subr.mxu0 0.0
        %1600 = vmatpush1.msra.mxu0 0.0
        %1601 = vmatprep.subr.mxu0 0.0
        %1602 = vmatpush1.msra.mxu0 0.0
        %1603 = vmatprep.subr.mxu0 0.0
        %1604 = vmatpush1.msra.mxu0 0.0
        %1605 = vmatprep.subr.mxu0 0.0
        %1606 = vmatpush1.msra.mxu0 0.0
        %1607 = vmatprep.subr.mxu0 0.0
        %1608 = vmatpush1.msra.mxu0 0.0
        %1609 = vmatprep.subr.mxu0 0.0
        %1610 = vmatpush1.msra.mxu0 0.0
        %1611 = vmatprep.subr.mxu0 0.0
        %1612 = vmatpush1.msra.mxu0 0.0
        %1613 = vmatprep.subr.mxu0 0.0
        %1614 = vmatpush1.msra.mxu0 0.0
        %1615 = vmatprep.subr.mxu0 0.0
        %1616 = vmatpush1.msra.mxu0 0.0
        %1617 = vmatprep.subr.mxu0 0.0
        %1618 = vmatpush1.msra.mxu0 0.0
        %1619 = vmatprep.subr.mxu0 0.0
        %1620 = vmatpush1.msra.mxu0 0.0
        %1621 = vmatprep.subr.mxu0 0.0
        %1622 = vmatpush1.msra.mxu0 0.0
        %1623 = vmatprep.subr.mxu0 0.0
        %1624 = vmatpush1.msra.mxu0 0.0
        %1625 = vmatprep.subr.mxu0 0.0
        %1626 = vmatpush1.msra.mxu0 0.0
        %1627 = vmatprep.subr.mxu0 0.0
        %1628 = vmatpush1.msra.mxu0 0.0
        %1629 = vmatprep.subr.mxu0 0.0
        %1630 = vmatpush1.msra.mxu0 0.0
        %1631 = vmatprep.subr.mxu0 0.0
        %1632 = vmatpush1.msra.mxu0 0.0
        %1633 = vmatprep.subr.mxu0 0.0
        %1634 = vmatpush1.msra.mxu0 0.0
        %1635 = vmatprep.subr.mxu0 0.0
        %1636 = vmatpush1.msra.mxu0 0.0
        %1637 = vmatprep.subr.mxu0 0.0
        %1638 = vmatpush1.msra.mxu0 0.0
        %1639 = vmatprep.subr.mxu0 0.0
        %1640 = vmatpush1.msra.mxu0 0.0
        %1641 = vmatprep.subr.mxu0 0.0
        %1642 = vmatpush1.msra.mxu0 0.0
        %1643 = vmatprep.subr.mxu0 0.0
        %1644 = vmatpush1.msra.mxu0 0.0
        %1645 = vmatprep.subr.mxu0 0.0
        %1646 = vmatpush1.msra.mxu0 0.0
        %1647 = vmatprep.subr.mxu0 0.0
        %1648 = vmatpush1.msra.mxu0 0.0
        %1649 = vmatprep.subr.mxu0 0.0
        %1650 = vmatpush1.msra.mxu0 0.0
        %1651 = vmatprep.mubr.f32.mxu0 0.0
        %1652 = vmatmul.mubr.f32.gmra.mrb[0].mxu0 %v1514
        %v1653 = vpop.f32.mrb[0].mxu0
        %v1654 = vadd.f32 0.0, %v1653
        %v1655 = vpop.f32.mrb[0].mxu0
        %1656 = vdwg.mxu0
        %v1657 = vadd.f32 %v1496, %v1583
        %v1658 = vadd.f32 %v1497, %v1585
        %v1659 = vadd.f32 %v1498, %v1654
        %v1660 = vld [vmem:[%s2] sm:$0xff]
        %1662 = vset.pattern.permute.xlu0 0
        %1663 = vperm.xlu0 %1662, %v1660
        %v1664 = vpop.permute.xlu0 %1663
        %v1666 = vadd.f32 %v1657, %v1664
        %v1667 = vadd.f32 %v1658, %v1664
        %v1668 = vadd.f32 %v1659, %v1664
        %v1669 = vmax.f32 %v1666, 0.0
        %v1670 = vmax.f32 %v1667, 0.0
        %v1671 = vmax.f32 %v1668, 0.0
        %v1672 = vld [vmem:[%s3] sm:$0x7]
        %v1674 = vlaneseq
        %v1675 = vshrl.u32 %v1674, 7
        %v1676 = vsub.s32 0, %v1675
        %v1677 = vrot.slane %v1672, %v1676
        %v1678 = vlaneseq
        %v1679 = vshrl.u32 %v1678, 7
        %v1680 = vsub.s32 1, %v1679
        %v1681 = vrot.slane %v1672, %v1680
        %v1682 = vlaneseq
        %v1683 = vshrl.u32 %v1682, 7
        %v1684 = vsub.s32 2, %v1683
        %v1685 = vrot.slane %v1672, %v1684
        %v1689 = vmul.f32 %v1669, %v1677
        %v1690 = vmul.f32 %v1670, %v1681
        %v1691 = vmul.f32 %v1671, %v1685
        %1695 = vrot.lane.b32.xlu0 %v1689, 127
        %v1696 = vpop.permute.xlu0 %1695
        %1697 = vrot.lane.b32.xlu0 %v1690, 127
        %v1698 = vpop.permute.xlu0 %1697
        %1699 = vrot.lane.b32.xlu0 %v1691, 127
        %v1700 = vpop.permute.xlu0 %1699
        %v1701 = vsel %vm238, %v1696, %v1698
        %v1702 = vsel %vm238, %v1698, %v1700
        %v1706 = vmax.f32 %v1689, %v1701
        %v1707 = vmax.f32 %v1690, %v1702
        %v1708 = vmax.f32 %v1691, %v1700
        %1712 = vrot.lane.b32.xlu0 %v1706, 110
        %v1713 = vpop.permute.xlu0 %1712
        %1714 = vrot.lane.b32.xlu0 %v1707, 110
        %v1715 = vpop.permute.xlu0 %1714
        %1716 = vrot.lane.b32.xlu0 %v1708, 110
        %v1717 = vpop.permute.xlu0 %1716
        %v1718 = vsel %vm702, %v1713, %v1715
        %v1719 = vsel %vm702, %v1715, %v1717
        %v1723 = vmax.f32 %v1706, %v1718
        %v1724 = vmax.f32 %v1707, %v1719
        %v1725 = vmax.f32 %v1708, %v1717
        %v1726 = vld [vmem:[%s4] sm:$0xff]
        %v1727 = vld [vmem:[%s4 + $0x8] sm:$0xff]
        %v1728 = vld [vmem:[%s4 + $0x10] sm:$0xff]
        %v1729 = vld [vmem:[%s4 + $0x18] sm:$0xff]
        %v1730 = vld [vmem:[%s4 + $0x20] sm:$0xff]
        %v1731 = vld [vmem:[%s4 + $0x28] sm:$0xff]
        %v1732 = vld [vmem:[%s4 + $0x30] sm:$0xff]
        %v1733 = vld [vmem:[%s4 + $0x38] sm:$0xff]
        %v1734 = vld [vmem:[%s4 + $0x40] sm:$0xff]
        %v1735 = vld [vmem:[%s4 + $0x48] sm:$0xff]
        %v1736 = vld [vmem:[%s4 + $0x50] sm:$0xff]
        %v1737 = vld [vmem:[%s4 + $0x58] sm:$0xff]
        %v1738 = vld [vmem:[%s4 + $0x60] sm:$0xff]
        %v1739 = vld [vmem:[%s4 + $0x68] sm:$0xff]
        %v1740 = vld [vmem:[%s4 + $0x70] sm:$0xff]
        %v1741 = vld [vmem:[%s4 + $0x78] sm:$0xff]
        %v1742 = vld [vmem:[%s4 + $0x80] sm:$0xff]
        %v1743 = vld [vmem:[%s4 + $0x88] sm:$0xff]
        %v1744 = vld [vmem:[%s4 + $0x90] sm:$0xff]
        %v1745 = vld [vmem:[%s4 + $0x98] sm:$0xff]
        %v1746 = vld [vmem:[%s4 + $0xa0] sm:$0xff]
        %v1747 = vld [vmem:[%s4 + $0xa8] sm:$0xff]
        %v1748 = vld [vmem:[%s4 + $0xb0] sm:$0xff]
        %v1749 = vld [vmem:[%s4 + $0xb8] sm:$0xff]
        %v1750 = vld [vmem:[%s4 + $0xc0] sm:$0xff]
        %v1751 = vld [vmem:[%s4 + $0xc8] sm:$0xff]
        %v1752 = vld [vmem:[%s4 + $0xd0] sm:$0xff]
        %v1753 = vld [vmem:[%s4 + $0xd8] sm:$0xff]
        %v1754 = vld [vmem:[%s4 + $0xe0] sm:$0xff]
        %v1755 = vld [vmem:[%s4 + $0xe8] sm:$0xff]
        %v1756 = vld [vmem:[%s4 + $0xf0] sm:$0xff]
        %v1757 = vld [vmem:[%s4 + $0xf8] sm:$0xff]
        %v1758 = vld [vmem:[%s4 + $0x100] sm:$0xff]
        %v1759 = vld [vmem:[%s4 + $0x108] sm:$0xff]
        %v1760 = vld [vmem:[%s4 + $0x110] sm:$0xff]
        %v1761 = vld [vmem:[%s4 + $0x118] sm:$0xff]
        %v1762 = vld [vmem:[%s4 + $0x120] sm:$0xff]
        %v1763 = vld [vmem:[%s4 + $0x128] sm:$0xff]
        %v1764 = vld [vmem:[%s4 + $0x130] sm:$0x1]
        %vm1765 = vcmask 400384
        %v1767 = vsel %vm1765, %v1725, 0
        %vm1769 = vcmask 1040384
        %v1771 = vsel %vm1769, %v1764, 0
        %1773 = vmatprep.subr.mxu0 0.0
        %1774 = vmatpush1.msra.mxu0 %v1726
        %1775 = vmatprep.subr.mxu0 0.0
        %1776 = vmatpush1.msra.mxu0 %v1727
        %1777 = vmatprep.subr.mxu0 0.0
        %1778 = vmatpush1.msra.mxu0 %v1728
        %1779 = vmatprep.subr.mxu0 0.0
        %1780 = vmatpush1.msra.mxu0 %v1729
        %1781 = vmatprep.subr.mxu0 0.0
        %1782 = vmatpush1.msra.mxu0 %v1730
        %1783 = vmatprep.subr.mxu0 0.0
        %1784 = vmatpush1.msra.mxu0 %v1731
        %1785 = vmatprep.subr.mxu0 0.0
        %1786 = vmatpush1.msra.mxu0 %v1732
        %1787 = vmatprep.subr.mxu0 0.0
        %1788 = vmatpush1.msra.mxu0 %v1733
        %1789 = vmatprep.subr.mxu0 0.0
        %1790 = vmatpush1.msra.mxu0 %v1734
        %1791 = vmatprep.subr.mxu0 0.0
        %1792 = vmatpush1.msra.mxu0 %v1735
        %1793 = vmatprep.subr.mxu0 0.0
        %1794 = vmatpush1.msra.mxu0 %v1736
        %1795 = vmatprep.subr.mxu0 0.0
        %1796 = vmatpush1.msra.mxu0 %v1737
        %1797 = vmatprep.subr.mxu0 0.0
        %1798 = vmatpush1.msra.mxu0 %v1738
        %1799 = vmatprep.subr.mxu0 0.0
        %1800 = vmatpush1.msra.mxu0 %v1739
        %1801 = vmatprep.subr.mxu0 0.0
        %1802 = vmatpush1.msra.mxu0 %v1740
        %1803 = vmatprep.subr.mxu0 0.0
        %1804 = vmatpush1.msra.mxu0 %v1741
        %1805 = vmatprep.subr.mxu0 0.0
        %1806 = vmatpush1.msra.mxu0 %v1742
        %1807 = vmatprep.subr.mxu0 0.0
        %1808 = vmatpush1.msra.mxu0 %v1743
        %1809 = vmatprep.subr.mxu0 0.0
        %1810 = vmatpush1.msra.mxu0 %v1744
        %1811 = vmatprep.subr.mxu0 0.0
        %1812 = vmatpush1.msra.mxu0 %v1745
        %1813 = vmatprep.subr.mxu0 0.0
        %1814 = vmatpush1.msra.mxu0 %v1746
        %1815 = vmatprep.subr.mxu0 0.0
        %1816 = vmatpush1.msra.mxu0 %v1747
        %1817 = vmatprep.subr.mxu0 0.0
        %1818 = vmatpush1.msra.mxu0 %v1748
        %1819 = vmatprep.subr.mxu0 0.0
        %1820 = vmatpush1.msra.mxu0 %v1749
        %1821 = vmatprep.subr.mxu0 0.0
        %1822 = vmatpush1.msra.mxu0 %v1750
        %1823 = vmatprep.subr.mxu0 0.0
        %1824 = vmatpush1.msra.mxu0 %v1751
        %1825 = vmatprep.subr.mxu0 0.0
        %1826 = vmatpush1.msra.mxu0 %v1752
        %1827 = vmatprep.subr.mxu0 0.0
        %1828 = vmatpush1.msra.mxu0 %v1753
        %1829 = vmatprep.subr.mxu0 0.0
        %1830 = vmatpush1.msra.mxu0 %v1754
        %1831 = vmatprep.subr.mxu0 0.0
        %1832 = vmatpush1.msra.mxu0 %v1755
        %1833 = vmatprep.subr.mxu0 0.0
        %1834 = vmatpush1.msra.mxu0 %v1756
        %1835 = vmatprep.subr.mxu0 0.0
        %1836 = vmatpush1.msra.mxu0 %v1757
        %1837 = vmatprep.mubr.f32.mxu0 %v1724
        %1838 = vmatmul.mubr.f32.gmra.mrb[0].mxu0 %v1723
        %v1839 = vpop.f32.mrb[0].mxu0
        %v1840 = vadd.f32 0.0, %v1839
        %v1841 = vpop.f32.mrb[0].mxu0
        %1842 = vdwg.mxu0
        %1843 = vmatprep.subr.mxu0 0.0
        %1844 = vmatpush1.msra.mxu0 %v1758
        %1845 = vmatprep.subr.mxu0 0.0
        %1846 = vmatpush1.msra.mxu0 %v1759
        %1847 = vmatprep.subr.mxu0 0.0
        %1848 = vmatpush1.msra.mxu0 %v1760
        %1849 = vmatprep.subr.mxu0 0.0
        %1850 = vmatpush1.msra.mxu0 %v1761
        %1851 = vmatprep.subr.mxu0 0.0
        %1852 = vmatpush1.msra.mxu0 %v1762
        %1853 = vmatprep.subr.mxu0 0.0
        %1854 = vmatpush1.msra.mxu0 %v1763
        %1855 = vmatprep.subr.mxu0 0.0
        %1856 = vmatpush1.msra.mxu0 %v1771
        %1857 = vmatprep.subr.mxu0 0.0
        %1858 = vmatpush1.msra.mxu0 0.0
        %1859 = vmatprep.subr.mxu0 0.0
        %1860 = vmatpush1.msra.mxu0 0.0
        %1861 = vmatprep.subr.mxu0 0.0
        %1862 = vmatpush1.msra.mxu0 0.0
        %1863 = vmatprep.subr.mxu0 0.0
        %1864 = vmatpush1.msra.mxu0 0.0
        %1865 = vmatprep.subr.mxu0 0.0
        %1866 = vmatpush1.msra.mxu0 0.0
        %1867 = vmatprep.subr.mxu0 0.0
        %1868 = vmatpush1.msra.mxu0 0.0
        %1869 = vmatprep.subr.mxu0 0.0
        %1870 = vmatpush1.msra.mxu0 0.0
        %1871 = vmatprep.subr.mxu0 0.0
        %1872 = vmatpush1.msra.mxu0 0.0
        %1873 = vmatprep.subr.mxu0 0.0
        %1874 = vmatpush1.msra.mxu0 0.0
        %1875 = vmatprep.subr.mxu0 0.0
        %1876 = vmatpush1.msra.mxu0 0.0
        %1877 = vmatprep.subr.mxu0 0.0
        %1878 = vmatpush1.msra.mxu0 0.0
        %1879 = vmatprep.subr.mxu0 0.0
        %1880 = vmatpush1.msra.mxu0 0.0
        %1881 = vmatprep.subr.mxu0 0.0
        %1882 = vmatpush1.msra.mxu0 0.0
        %1883 = vmatprep.subr.mxu0 0.0
        %1884 = vmatpush1.msra.mxu0 0.0
        %1885 = vmatprep.subr.mxu0 0.0
        %1886 = vmatpush1.msra.mxu0 0.0
        %1887 = vmatprep.subr.mxu0 0.0
        %1888 = vmatpush1.msra.mxu0 0.0
        %1889 = vmatprep.subr.mxu0 0.0
        %1890 = vmatpush1.msra.mxu0 0.0
        %1891 = vmatprep.subr.mxu0 0.0
        %1892 = vmatpush1.msra.mxu0 0.0
        %1893 = vmatprep.subr.mxu0 0.0
        %1894 = vmatpush1.msra.mxu0 0.0
        %1895 = vmatprep.subr.mxu0 0.0
        %1896 = vmatpush1.msra.mxu0 0.0
        %1897 = vmatprep.subr.mxu0 0.0
        %1898 = vmatpush1.msra.mxu0 0.0
        %1899 = vmatprep.subr.mxu0 0.0
        %1900 = vmatpush1.msra.mxu0 0.0
        %1901 = vmatprep.subr.mxu0 0.0
        %1902 = vmatpush1.msra.mxu0 0.0
        %1903 = vmatprep.subr.mxu0 0.0
        %1904 = vmatpush1.msra.mxu0 0.0
        %1905 = vmatprep.subr.mxu0 0.0
        %1906 = vmatpush1.msra.mxu0 0.0
        %1907 = vmatprep.mubr.f32.mxu0 0.0
        %1908 = vmatmul.mubr.f32.gmra.mrb[0].mxu0 %v1767
        %v1909 = vpop.f32.mrb[0].mxu0
        %v1910 = vadd.f32 %v1840, %v1909
        %v1911 = vpop.f32.mrb[0].mxu0
        %1912 = vdwg.mxu0
        %vm1913 = vcmask 662528
        %1914 = vst.msk [vmem:[%s217] sm:$0xff] %vm1913, %v1910
        %s1915 = sand.u32 %s137, 1
        %s1916 = scalar_lea.sflag [#allocation3], %s1915
        %s1917 = sand.u32 %s137, 1
        %s1918 = smul.addr %s1917, 8
        %s1919 = scalar_lea.vmem [#allocation2], %s1918
        // Predicated region
        $region41: #{tpu_custom_call.1} parent=39 // pred_check
          %p1920 = pneg %p147
        $region42: #{tpu_custom_call.1} parent=39 // pred_check_branch
          %1922 = sbr.rel (%p1920) target = $region44
        $region43: #{tpu_custom_call.1} parent=39 // pred_region
          %s1924 = ssub.s32 128, 128
          %1925 = vsyncadd %s1916, %s1924
          %s1926 = smul.addr %s19, 128
          %s1927 = scalar_lea.hbm %s5, %s1926
          %s1929 = sshll.u32 %s1919, 4
          %s1930 = int_to_ptr.vmem [resolvable:$true] %s1929
          %1932 = dma.vmem_to_hbm [thread:$0]  %s1930, 128, %s1927, %s1916
        $region44: #{tpu_custom_call.1} parent=39 // pred_fallthru
          _
      $region40: #{tpu_custom_call.1} parent=5 // pred_fallthru
        _
      %p1933 = scmp.le.s32.totalorder 2, %s14
      // Predicated region
      $region45: #{tpu_custom_call.1} parent=5 // pred_check
        %p1934 = pneg %p1933
      $region46: #{tpu_custom_call.1} parent=5 // pred_check_branch
        %1936 = sbr.rel (%p1934) target = $region48
      $region47: #{tpu_custom_call.1} parent=5 // pred_region
        %s1937 = ssub.s32 %s14, 2
        // Predicated region
        $region49: #{tpu_custom_call.1} parent=47 // pred_check
          %p1938 = pneg %p153
        $region50: #{tpu_custom_call.1} parent=47 // pred_check_branch
          %1940 = sbr.rel (%p1938) target = $region52
        $region51: #{tpu_custom_call.1} parent=47 // pred_region
          %s1941 = sand.u32 %s138, 1
          %s1942 = scalar_lea.sflag [#allocation3], %s1941
          %s1943 = sand.u32 %s138, 1
          %s1944 = smul.addr %s1943, 8
          %s1945 = scalar_lea.vmem [#allocation2], %s1944
          %1946 = dma.done %s1942, 128
        $region52: #{tpu_custom_call.1} parent=47 // pred_fallthru
          _
      $region48: #{tpu_custom_call.1} parent=5 // pred_fallthru
        _
    $region6: #{tpu_custom_call.1} parent=1 // loop_footer
      %s18 = sadd.s32 1, %s14
    $region7: #{tpu_custom_call.1} parent=1 // loop_footer_branch
      %13 = sbr.rel target = $region3
    $region8: #{tpu_custom_call.1} parent=1 // loop_exit
      _
    %1947 = vsyncpa [#allocation3], 1
    %s1948 = scalar_lea.sflag [#allocation3], 1
    %1949 = vsyncpa %s1948, 1

</llo_original>
